<compile_context>
chip_gen: v6e
topology: v6e:2x2x1
jax: 0.10.0
libtpu: 0.0.40
codegen_flags: <defaults>
</compile_context>

<pallas_src>
import functools

import jax
import jax.numpy as jnp
from jax.experimental import pallas as pl
from jax.experimental.pallas import tpu as pltpu

BN_EPS = 1e-5
NEG_PAD = -1e30            # finite large-negative bias pad (avoids (-inf)-(-inf) NaNs)


def _round_up(a, b):
    return ((a + b - 1) // b) * b


def _cdiv(a, b):
    return -(-a // b)


# ---------------------------------------------------------------------------
# Kernel
# ---------------------------------------------------------------------------
def _gating_kernel(n_hidden, x_ref, *refs):
    # refs layout: w_0 .. w_{n_hidden-1}, [b_hidden], w_out, b_out, logit_scale(SMEM), out
    out_ref = refs[-1]
    ls_ref = refs[-2]
    b_out_ref = refs[-3]
    w_out_ref = refs[-4]
    has_hidden_bias = n_hidden > 1
    b_hid_ref = refs[-5] if has_hidden_bias else None
    w_refs = refs[:n_hidden]

    # Layer 0: Linear (no bias; its BN is folded forward into layer 1) + ReLU.
    # x is already bf16 -> straight onto the MXU, f32 accumulation.
    h = jnp.dot(x_ref[...], w_refs[0][...], preferred_element_type=jnp.float32)
    h = jnp.maximum(h, 0.0)

    # Layers 1..n-1: previous BN folded into (W'_i, b_i):  ReLU(h @ W'_i + b_i).
    for i in range(1, n_hidden):
        w = w_refs[i][...]
        h = jnp.dot(h.astype(w.dtype), w, preferred_element_type=jnp.float32)
        h = jnp.maximum(h + b_hid_ref[i - 1:i, :], 0.0)

    # Output layer: last BN and 1/temperature folded into (w_out, b_out); columns padded
    # to 128 lanes (padded bias = -1e30 -> exp underflows to exactly 0 in f32).
    w_out = w_out_ref[...]
    z = jnp.dot(h.astype(w_out.dtype), w_out,
                preferred_element_type=jnp.float32) + b_out_ref[...]
    z = z - jnp.max(z, axis=-1, keepdims=True)
    e = jnp.exp(z)
    p = e * pl.reciprocal(jnp.sum(e, axis=-1, keepdims=True), approx=True)
    p = p * ls_ref[0, 0]
    out_ref[...] = p[:, :out_ref.shape[-1]].astype(out_ref.dtype)


# ---------------------------------------------------------------------------
# Parameters
# ---------------------------------------------------------------------------
def init_gating_params(key, in_features, out_features, hidden_dim, n_hidden,
                       logit_scale=1.0):
    """Deterministic synthetic parameters (shapes mirror the PyTorch module, all f32)."""
    params = {"hidden": [], "logit_scale": jnp.full((1, 1), logit_scale, jnp.float32)}
    f_in = in_features
    for _ in range(n_hidden):
        key, kw, kg, kb, km, kv = jax.random.split(key, 6)
        params["hidden"].append({
            "w":     jax.random.normal(kw, (f_in, hidden_dim), jnp.float32) * 0.05,
            "gamma": 1.0 + 0.1 * jax.random.normal(kg, (1, hidden_dim), jnp.float32),
            "beta":  0.1 * jax.random.normal(kb, (1, hidden_dim), jnp.float32),
            "mean":  0.1 * jax.random.normal(km, (1, hidden_dim), jnp.float32),
            "var":   jnp.abs(jax.random.normal(kv, (1, hidden_dim), jnp.float32)) + 0.5,
        })
        f_in = hidden_dim
    key, kwo, kbo = jax.random.split(key, 3)
    params["w_out"] = jax.random.normal(kwo, (f_in, out_features), jnp.float32) * 0.05
    params["b_out"] = 0.1 * jax.random.normal(kbo, (1, out_features), jnp.float32)
    return params


def fold_gating_params(raw, temperature=10.0, weight_dtype=jnp.bfloat16,
                       out_lane_multiple=128):
    """One-time transform: fold eval-mode BN into the NEXT layer's weights/bias,
    fold 1/temperature into (w_out, b_out), pad the output layer to 128 lanes,
    and cast matmul weights to bf16.  All folding done in f32."""
    n_hidden = len(raw["hidden"])
    scales, shifts = [], []
    for layer in raw["hidden"]:
        s = layer["gamma"] * jax.lax.rsqrt(layer["var"] + BN_EPS)        # (1, H)
        scales.append(s)
        shifts.append(layer["beta"] - layer["mean"] * s)                 # (1, H)

    w_hidden = [raw["hidden"][0]["w"].astype(weight_dtype)]              # layer 0 unchanged
    b_rows = []
    for i in range(1, n_hidden):
        w = raw["hidden"][i]["w"]                                        # (H, H) f32
        w_hidden.append((scales[i - 1].reshape(-1, 1) * w).astype(weight_dtype))
        b_rows.append(shifts[i - 1] @ w)                                 # (1, H)

    inv_t = 1.0 / float(temperature)
    w_out = scales[-1].reshape(-1, 1) * raw["w_out"] * inv_t             # (H, out)
    b_out = (raw["b_out"] + shifts[-1] @ raw["w_out"]) * inv_t           # (1, out)

    out_features = raw["w_out"].shape[1]
    outp = _round_up(out_features, out_lane_multiple)
    if outp != out_features:
        w_out = jnp.pad(w_out, ((0, 0), (0, outp - out_features)))
        b_out = jnp.pad(b_out, ((0, 0), (0, outp - out_features)),
                        constant_values=NEG_PAD)

    return {
        "w_hidden": w_hidden,                                            # list, bf16
        "b_hidden": (jnp.concatenate(b_rows, 0).astype(jnp.float32)
                     if b_rows else None),                               # (n_hidden-1, H)
        "w_out": w_out.astype(weight_dtype),                             # (H, outp) bf16
        "b_out": b_out.astype(jnp.float32),                              # (1, outp)
        "logit_scale": raw["logit_scale"].reshape(1, 1).astype(jnp.float32),
        "out_features": out_features,
    }


# ---------------------------------------------------------------------------
# Tiling helpers
# ---------------------------------------------------------------------------
def _cap_block_batch(block_batch, F, H, outp, out_cols, resident_bytes, vmem_budget):
    """Largest batch tile that keeps double-buffered I/O + intermediates under budget."""
    per_row = (2 * F * 2          # double-buffered bf16 x tile
               + 2 * out_cols * 4  # double-buffered f32 out tile
               + 4 * H * 4         # live f32/bf16 intermediates (conservative)
               + outp * 4)         # padded logits / softmax tile
    avail = max(vmem_budget - 2 * resident_bytes, 1 << 20)
    cap = max(16, (avail // per_row) // 16 * 16)
    return int(min(block_batch, cap))


def _choose_batch_tile(B, block_batch, row_align=16):
    """Tile = multiple of 16 rows (bf16 sublane packing); even step count when B spans
    more than one tile so both v7x TensorCores get work."""
    bp_min = _round_up(B, row_align)
    if bp_min <= row_align:
        return bp_min
    steps = max(2, _cdiv(bp_min, block_batch))
    steps = _round_up(steps, 2)
    return _round_up(_cdiv(bp_min, steps), row_align)


# ---------------------------------------------------------------------------
# Forward
# ---------------------------------------------------------------------------
def gating_forward(x, fparams, block_batch=4096, vmem_budget_mb=40,
                   lane_dense_output=True):
    """Pallas forward pass on folded params. x: (batch, in_features)."""
    n_hidden = len(fparams["w_hidden"])
    out_features = fparams["out_features"]
    B, F = x.shape
    H = fparams["w_hidden"][-1].shape[1]
    outp = fparams["w_out"].shape[1]
    out_cols = outp if lane_dense_output else out_features

    # bf16 input stream: the first bf16 dot truncates x anyway, so this is numerically
    # identical and halves the dominant HBM input bytes.
    x = x.astype(jnp.bfloat16)

    resident_bytes = sum(int(w.size) * w.dtype.itemsize for w in fparams["w_hidden"])
    resident_bytes += int(fparams["w_out"].size) * fparams["w_out"].dtype.itemsize
    if fparams["b_hidden"] is not None:
        resident_bytes += int(fparams["b_hidden"].size) * 4
    resident_bytes += int(fparams["b_out"].size) * 4

    block_batch = _cap_block_batch(block_batch, F, H, outp, out_cols,
                                   resident_bytes, vmem_budget_mb * (1 << 20))
    tb = _choose_batch_tile(B, block_batch)
    bp = _round_up(B, tb)
    if bp != B:
        x = jnp.pad(x, ((0, bp - B), (0, 0)))
    grid = (bp // tb,)

    cost = pl.CostEstimate(
        flops=int(2 * bp * (F * H + max(n_hidden - 1, 0) * H * H + H * outp)),
        transcendentals=int(bp * (outp + 1)),
        bytes_accessed=int(bp * (F * 2 + out_cols * 4) + resident_bytes),
    )

    operands = [x, *fparams["w_hidden"]]
    if fparams["b_hidden"] is not None:
        operands.append(fparams["b_hidden"])
    operands += [fparams["w_out"], fparams["b_out"], fparams["logit_scale"]]

    kernel = functools.partial(_gating_kernel, n_hidden)

    def run(single_buffer_weights):
        def resident(shape):
            # Constant-index-map operands stay VMEM-resident; single-buffer them.
            if single_buffer_weights:
                return pl.BlockSpec(shape, lambda i: (0, 0),
                                    pipeline_mode=pl.Buffered(1))
            return pl.BlockSpec(shape, lambda i: (0, 0))

        in_specs = [pl.BlockSpec((tb, F), lambda i: (i, 0))]
        in_specs += [resident(w.shape) for w in fparams["w_hidden"]]
        if fparams["b_hidden"] is not None:
            in_specs.append(resident(fparams["b_hidden"].shape))
        in_specs.append(resident(fparams["w_out"].shape))
        in_specs.append(resident(fparams["b_out"].shape))
        in_specs.append(pl.BlockSpec((1, 1), lambda i: (0, 0),
                                     memory_space=pltpu.MemorySpace.SMEM))

        return pl.pallas_call(
            kernel,
            out_shape=jax.ShapeDtypeStruct((bp, out_cols), jnp.float32),
            grid_spec=pltpu.PrefetchScalarGridSpec(
                num_scalar_prefetch=0,
                grid=grid,
                in_specs=in_specs,
                out_specs=pl.BlockSpec((tb, out_cols), lambda i: (i, 0)),
            ),
            compiler_params=pltpu.CompilerParams(
                # batch axis is embarrassingly parallel -> shards across v7x TensorCores.
                # TODO(synk): if lowering shows it does not shard on v7x, switch to
                # pltpu.CORE_PARALLEL / pl.core_map on the batch axis.
                dimension_semantics=("parallel",),
                vmem_limit_bytes=int(min(vmem_budget_mb + 16, 56) * (1 << 20)),
            ),
            cost_estimate=cost,
        )(*operands)

    try:
        out = run(True)
    except Exception:
        # pipeline_mode=pl.Buffered(1) not supported on this jax build -> default buffering.
        out = run(False)

    return out[:B, :out_features]


# ---------------------------------------------------------------------------
# References
# ---------------------------------------------------------------------------
def gating_forward_ref(x, raw, temperature=10.0):
    """Pure-JAX reference of the ORIGINAL module (unfolded BN, full f32)."""
    h = x.astype(jnp.float32)
    for layer in raw["hidden"]:
        h = jnp.maximum(h @ layer["w"], 0.0)
        h = ((h - layer["mean"]) * jax.lax.rsqrt(layer["var"] + BN_EPS)
             * layer["gamma"] + layer["beta"])
    logits = h @ raw["w_out"] + raw["b_out"]
    return jax.nn.softmax(logits / temperature, axis=1) * raw["logit_scale"][0, 0]


def gating_forward_ref_folded(x, fparams):
    """Pure-JAX reference matching the kernel's folded / bf16 math exactly."""
    h = jnp.dot(x.astype(jnp.bfloat16), fparams["w_hidden"][0],
                preferred_element_type=jnp.float32)
    h = jnp.maximum(h, 0.0)
    for i, w in enumerate(fparams["w_hidden"][1:]):
        h = jnp.dot(h.astype(w.dtype), w, preferred_element_type=jnp.float32)
        h = jnp.maximum(h + fparams["b_hidden"][i:i + 1], 0.0)
    z = jnp.dot(h.astype(fparams["w_out"].dtype), fparams["w_out"],
                preferred_element_type=jnp.float32) + fparams["b_out"]
    p = jax.nn.softmax(z, axis=-1) * fparams["logit_scale"][0, 0]
    return p[:, :fparams["out_features"]]


if __name__ == "__main__":
    # Small, forward-consistent shapes: x is (batch, in_features)
    batch, in_features, hidden_dim, out_features, n_hidden = 8, 32, 128, 8, 3
    temperature = 10.0

    key = jax.random.PRNGKey(0)
    kx, kp = jax.random.split(key)
    x = jax.random.normal(kx, (batch, in_features), jnp.float32)

    raw_params = init_gating_params(kp, in_features, out_features, hidden_dim,
                                    n_hidden, logit_scale=1.0)
    # One-time parameter transform (BN + 1/T folded into weights, 128-lane out pad, bf16).
    fparams = fold_gating_params(raw_params, temperature=temperature)

    out = gating_forward(x, fparams)
    out = jax.block_until_ready(out)

    assert out.shape == (batch, out_features)
    assert bool(jnp.all(jnp.isfinite(out)))

    # Tight check against a reference doing the exact same folded/bf16 math
    # (tolerance loosened slightly for the approx EUP reciprocal in softmax).
    ref_exact = gating_forward_ref_folded(x, fparams)
    assert jnp.allclose(out, ref_exact, atol=2e-3, rtol=2e-3), "mismatch vs folded reference"

    # Looser check against the original-module f32 reference (bf16 weight rounding).
    ref_module = gating_forward_ref(x, raw_params, temperature=temperature)
    assert jnp.allclose(out, ref_module, atol=3e-2, rtol=3e-2), "mismatch vs original module"

    # Rows of the softmax output sum to logit_scale (= 1.0 here).
    assert jnp.allclose(out.sum(axis=1), jnp.ones((batch,)), atol=2e-3)

    # Multi-step grid path (even step count -> both v7x TensorCores) + narrow-store path.
    x_big = jax.random.normal(jax.random.PRNGKey(1), (96, in_features), jnp.float32)
    out_big = jax.block_until_ready(
        gating_forward(x_big, fparams, lane_dense_output=False))
    ref_big = gating_forward_ref_folded(x_big, fparams)
    assert out_big.shape == (96, out_features)
    assert jnp.allclose(out_big, ref_big, atol=2e-3, rtol=2e-3), "mismatch on multi-tile path"

    # TODO(synk): BatchNorm1d training-mode running-stat updates are not implemented
    # (kernel reproduces eval/inference mode only, as used for reward-model gating).

    print("KERNEL_OK")
</pallas_src>

<mosaic_0001>
module attributes {stable_mosaic.version = 11 : i64} {
  func.func @_gating_kernel(%arg0: i32, %arg1: memref<16x32xbf16, #tpu.memory_space<vmem>>, %arg2: memref<32x128xbf16, #tpu.memory_space<vmem>>, %arg3: memref<128x128xbf16, #tpu.memory_space<vmem>>, %arg4: memref<128x128xbf16, #tpu.memory_space<vmem>>, %arg5: memref<2x128xf32, #tpu.memory_space<vmem>>, %arg6: memref<128x128xbf16, #tpu.memory_space<vmem>>, %arg7: memref<1x128xf32, #tpu.memory_space<vmem>>, %arg8: memref<1x1xf32, #tpu.memory_space<smem>>, %arg9: memref<16x128xf32, #tpu.memory_space<vmem>>) attributes {dimension_semantics = [#tpu.dimension_semantics<parallel>], iteration_bounds = array<i64: 1>, scalar_prefetch = 0 : i64, scratch_operands = 0 : i64, tpu.core_type = #tpu.core_type<tc>, window_params = [{transform_indices = @transform_0, window_bounds = array<i64: 16, 32>}, {pipeline_mode = #tpu.pipeline_mode<synchronous>, transform_indices = @transform_1, window_bounds = array<i64: 32, 128>}, {pipeline_mode = #tpu.pipeline_mode<synchronous>, transform_indices = @transform_2, window_bounds = array<i64: 128, 128>}, {pipeline_mode = #tpu.pipeline_mode<synchronous>, transform_indices = @transform_3, window_bounds = array<i64: 128, 128>}, {pipeline_mode = #tpu.pipeline_mode<synchronous>, transform_indices = @transform_4, window_bounds = array<i64: 2, 128>}, {pipeline_mode = #tpu.pipeline_mode<synchronous>, transform_indices = @transform_5, window_bounds = array<i64: 128, 128>}, {pipeline_mode = #tpu.pipeline_mode<synchronous>, transform_indices = @transform_6, window_bounds = array<i64: 1, 128>}, {transform_indices = @transform_7, window_bounds = array<i64: 1, 1>}, {transform_indices = @transform_8, window_bounds = array<i64: 16, 128>}]} {
    %c0 = arith.constant 0 : index
    %c0_0 = arith.constant 0 : index
    %0 = vector.load %arg1[%c0, %c0_0] : memref<16x32xbf16, #tpu.memory_space<vmem>>, vector<16x32xbf16>
    %c0_1 = arith.constant 0 : index
    %c0_2 = arith.constant 0 : index
    %1 = vector.load %arg2[%c0_1, %c0_2] : memref<32x128xbf16, #tpu.memory_space<vmem>>, vector<32x128xbf16>
    %cst = arith.constant dense<0.000000e+00> : vector<16x128xf32>
    %2 = tpu.matmul %0, %1, %cst {dimension_numbers = #tpu.dot_dimension_numbers<[1], [0], [0], [1], [0, 0, 1, 1], [], []>} : vector<16x32xbf16>, vector<32x128xbf16>, vector<16x128xf32> -> vector<16x128xf32>
    %cst_3 = arith.constant 0.000000e+00 : f32
    %3 = vector.broadcast %cst_3 : f32 to vector<16x128xf32>
    %4 = arith.maximumf %2, %3 : vector<16x128xf32>
    %c0_4 = arith.constant 0 : index
    %c0_5 = arith.constant 0 : index
    %5 = vector.load %arg3[%c0_4, %c0_5] : memref<128x128xbf16, #tpu.memory_space<vmem>>, vector<128x128xbf16>
    %6 = arith.truncf %4 : vector<16x128xf32> to vector<16x128xbf16>
    %cst_6 = arith.constant dense<0.000000e+00> : vector<16x128xf32>
    %7 = tpu.matmul %6, %5, %cst_6 {dimension_numbers = #tpu.dot_dimension_numbers<[1], [0], [0], [1], [0, 0, 1, 1], [], []>} : vector<16x128xbf16>, vector<128x128xbf16>, vector<16x128xf32> -> vector<16x128xf32>
    %c0_7 = arith.constant 0 : index
    %c0_8 = arith.constant 0 : index
    %8 = vector.load %arg5[%c0_7, %c0_8] : memref<2x128xf32, #tpu.memory_space<vmem>>, vector<1x128xf32>
    %9 = vector.broadcast %8 : vector<1x128xf32> to vector<16x128xf32>
    %10 = arith.addf %7, %9 : vector<16x128xf32>
    %cst_9 = arith.constant 0.000000e+00 : f32
    %11 = vector.broadcast %cst_9 : f32 to vector<16x128xf32>
    %12 = arith.maximumf %10, %11 : vector<16x128xf32>
    %c0_10 = arith.constant 0 : index
    %c0_11 = arith.constant 0 : index
    %13 = vector.load %arg4[%c0_10, %c0_11] : memref<128x128xbf16, #tpu.memory_space<vmem>>, vector<128x128xbf16>
    %14 = arith.truncf %12 : vector<16x128xf32> to vector<16x128xbf16>
    %cst_12 = arith.constant dense<0.000000e+00> : vector<16x128xf32>
    %15 = tpu.matmul %14, %13, %cst_12 {dimension_numbers = #tpu.dot_dimension_numbers<[1], [0], [0], [1], [0, 0, 1, 1], [], []>} : vector<16x128xbf16>, vector<128x128xbf16>, vector<16x128xf32> -> vector<16x128xf32>
    %c1 = arith.constant 1 : index
    %c0_13 = arith.constant 0 : index
    %16 = vector.load %arg5[%c1, %c0_13] : memref<2x128xf32, #tpu.memory_space<vmem>>, vector<1x128xf32>
    %17 = vector.broadcast %16 : vector<1x128xf32> to vector<16x128xf32>
    %18 = arith.addf %15, %17 : vector<16x128xf32>
    %cst_14 = arith.constant 0.000000e+00 : f32
    %19 = vector.broadcast %cst_14 : f32 to vector<16x128xf32>
    %20 = arith.maximumf %18, %19 : vector<16x128xf32>
    %c0_15 = arith.constant 0 : index
    %c0_16 = arith.constant 0 : index
    %21 = vector.load %arg6[%c0_15, %c0_16] : memref<128x128xbf16, #tpu.memory_space<vmem>>, vector<128x128xbf16>
    %22 = arith.truncf %20 : vector<16x128xf32> to vector<16x128xbf16>
    %cst_17 = arith.constant dense<0.000000e+00> : vector<16x128xf32>
    %23 = tpu.matmul %22, %21, %cst_17 {dimension_numbers = #tpu.dot_dimension_numbers<[1], [0], [0], [1], [0, 0, 1, 1], [], []>} : vector<16x128xbf16>, vector<128x128xbf16>, vector<16x128xf32> -> vector<16x128xf32>
    %c0_18 = arith.constant 0 : index
    %c0_19 = arith.constant 0 : index
    %24 = vector.load %arg7[%c0_18, %c0_19] : memref<1x128xf32, #tpu.memory_space<vmem>>, vector<1x128xf32>
    %25 = vector.broadcast %24 : vector<1x128xf32> to vector<16x128xf32>
    %26 = arith.addf %23, %25 : vector<16x128xf32>
    %cst_20 = arith.constant dense<0xFF800000> : vector<16xf32>
    %27 = vector.multi_reduction <maximumf>, %26, %cst_20 [1] : vector<16x128xf32> to vector<16xf32>
    %28 = vector.shape_cast %27 : vector<16xf32> to vector<16x1xf32>
    %29 = vector.broadcast %28 : vector<16x1xf32> to vector<16x128xf32>
    %30 = arith.subf %26, %29 : vector<16x128xf32>
    %31 = math.exp %30 : vector<16x128xf32>
    %cst_21 = arith.constant dense<0.000000e+00> : vector<16xf32>
    %32 = vector.multi_reduction <add>, %31, %cst_21 [1] : vector<16x128xf32> to vector<16xf32>
    %33 = vector.shape_cast %32 : vector<16xf32> to vector<16x1xf32>
    %34 = tpu.reciprocal %33 {approx = true} : vector<16x1xf32> -> vector<16x1xf32>
    %35 = vector.broadcast %34 : vector<16x1xf32> to vector<16x128xf32>
    %36 = arith.mulf %31, %35 : vector<16x128xf32>
    %c0_22 = arith.constant 0 : index
    %c0_23 = arith.constant 0 : index
    %37 = memref.load %arg8[%c0_22, %c0_23] : memref<1x1xf32, #tpu.memory_space<smem>>
    %38 = vector.broadcast %37 : f32 to vector<16x128xf32>
    %39 = arith.mulf %36, %38 : vector<16x128xf32>
    %c0_24 = arith.constant 0 : index
    %c0_25 = arith.constant 0 : index
    %40 = vector.load %arg9[%c0_24, %c0_25] : memref<16x128xf32, #tpu.memory_space<vmem>>, vector<16x128xf32>
    tpu.vector_store %arg9[%c0_24, %c0_25], %39 {strides = array<i32>} : memref<16x128xf32, #tpu.memory_space<vmem>>, vector<16x128xf32>,
    return
  }
  func.func @transform_0(%arg0: i32) -> (i32, i32) {
    %c0_i32 = arith.constant 0 : i32
    %c0_i32_0 = arith.constant 0 : i32
    return %arg0, %c0_i32 : i32, i32
  }
  func.func @transform_1(%arg0: i32) -> (i32, i32) {
    %c0_i32 = arith.constant 0 : i32
    %c0_i32_0 = arith.constant 0 : i32
    %c0_i32_1 = arith.constant 0 : i32
    return %c0_i32, %c0_i32_0 : i32, i32
  }
  func.func @transform_2(%arg0: i32) -> (i32, i32) {
    %c0_i32 = arith.constant 0 : i32
    %c0_i32_0 = arith.constant 0 : i32
    %c0_i32_1 = arith.constant 0 : i32
    return %c0_i32, %c0_i32_0 : i32, i32
  }
  func.func @transform_3(%arg0: i32) -> (i32, i32) {
    %c0_i32 = arith.constant 0 : i32
    %c0_i32_0 = arith.constant 0 : i32
    %c0_i32_1 = arith.constant 0 : i32
    return %c0_i32, %c0_i32_0 : i32, i32
  }
  func.func @transform_4(%arg0: i32) -> (i32, i32) {
    %c0_i32 = arith.constant 0 : i32
    %c0_i32_0 = arith.constant 0 : i32
    %c0_i32_1 = arith.constant 0 : i32
    return %c0_i32, %c0_i32_0 : i32, i32
  }
  func.func @transform_5(%arg0: i32) -> (i32, i32) {
    %c0_i32 = arith.constant 0 : i32
    %c0_i32_0 = arith.constant 0 : i32
    %c0_i32_1 = arith.constant 0 : i32
    return %c0_i32, %c0_i32_0 : i32, i32
  }
  func.func @transform_6(%arg0: i32) -> (i32, i32) {
    %c0_i32 = arith.constant 0 : i32
    %c0_i32_0 = arith.constant 0 : i32
    %c0_i32_1 = arith.constant 0 : i32
    return %c0_i32, %c0_i32_0 : i32, i32
  }
  func.func @transform_7(%arg0: i32) -> (i32, i32) {
    %c0_i32 = arith.constant 0 : i32
    %c0_i32_0 = arith.constant 0 : i32
    %c0_i32_1 = arith.constant 0 : i32
    return %c0_i32, %c0_i32_0 : i32, i32
  }
  func.func @transform_8(%arg0: i32) -> (i32, i32) {
    %c0_i32 = arith.constant 0 : i32
    %c0_i32_0 = arith.constant 0 : i32
    return %arg0, %c0_i32 : i32, i32
  }
}

module attributes {stable_mosaic.version = 11 : i64} {
  func.func @_gating_kernel(%arg0: i32, %arg1: memref<16x32xbf16, #tpu.memory_space<vmem>>, %arg2: memref<32x128xbf16, #tpu.memory_space<vmem>>, %arg3: memref<128x128xbf16, #tpu.memory_space<vmem>>, %arg4: memref<128x128xbf16, #tpu.memory_space<vmem>>, %arg5: memref<2x128xf32, #tpu.memory_space<vmem>>, %arg6: memref<128x128xbf16, #tpu.memory_space<vmem>>, %arg7: memref<1x128xf32, #tpu.memory_space<vmem>>, %arg8: memref<1x1xf32, #tpu.memory_space<smem>>, %arg9: memref<16x128xf32, #tpu.memory_space<vmem>>) attributes {dimension_semantics = [#tpu.dimension_semantics<parallel>], iteration_bounds = array<i64: 1>, scalar_prefetch = 0 : i64, scratch_operands = 0 : i64, tpu.core_type = #tpu.core_type<tc>, window_params = [{transform_indices = @transform_0, window_bounds = array<i64: 16, 32>}, {pipeline_mode = #tpu.pipeline_mode<synchronous>, transform_indices = @transform_1, window_bounds = array<i64: 32, 128>}, {pipeline_mode = #tpu.pipeline_mode<synchronous>, transform_indices = @transform_2, window_bounds = array<i64: 128, 128>}, {pipeline_mode = #tpu.pipeline_mode<synchronous>, transform_indices = @transform_3, window_bounds = array<i64: 128, 128>}, {pipeline_mode = #tpu.pipeline_mode<synchronous>, transform_indices = @transform_4, window_bounds = array<i64: 2, 128>}, {pipeline_mode = #tpu.pipeline_mode<synchronous>, transform_indices = @transform_5, window_bounds = array<i64: 128, 128>}, {pipeline_mode = #tpu.pipeline_mode<synchronous>, transform_indices = @transform_6, window_bounds = array<i64: 1, 128>}, {transform_indices = @transform_7, window_bounds = array<i64: 1, 1>}, {transform_indices = @transform_8, window_bounds = array<i64: 16, 128>}]} {
    %c0 = arith.constant 0 : index
    %c0_0 = arith.constant 0 : index
    %0 = vector.load %arg1[%c0, %c0_0] : memref<16x32xbf16, #tpu.memory_space<vmem>>, vector<16x32xbf16>
    %c0_1 = arith.constant 0 : index
    %c0_2 = arith.constant 0 : index
    %1 = vector.load %arg2[%c0_1, %c0_2] : memref<32x128xbf16, #tpu.memory_space<vmem>>, vector<32x128xbf16>
    %cst = arith.constant dense<0.000000e+00> : vector<16x128xf32>
    %2 = tpu.matmul %0, %1, %cst {dimension_numbers = #tpu.dot_dimension_numbers<[1], [0], [0], [1], [0, 0, 1, 1], [], []>} : vector<16x32xbf16>, vector<32x128xbf16>, vector<16x128xf32> -> vector<16x128xf32>
    %cst_3 = arith.constant 0.000000e+00 : f32
    %3 = vector.broadcast %cst_3 : f32 to vector<16x128xf32>
    %4 = arith.maximumf %2, %3 : vector<16x128xf32>
    %c0_4 = arith.constant 0 : index
    %c0_5 = arith.constant 0 : index
    %5 = vector.load %arg3[%c0_4, %c0_5] : memref<128x128xbf16, #tpu.memory_space<vmem>>, vector<128x128xbf16>
    %6 = arith.truncf %4 : vector<16x128xf32> to vector<16x128xbf16>
    %cst_6 = arith.constant dense<0.000000e+00> : vector<16x128xf32>
    %7 = tpu.matmul %6, %5, %cst_6 {dimension_numbers = #tpu.dot_dimension_numbers<[1], [0], [0], [1], [0, 0, 1, 1], [], []>} : vector<16x128xbf16>, vector<128x128xbf16>, vector<16x128xf32> -> vector<16x128xf32>
    %c0_7 = arith.constant 0 : index
    %c0_8 = arith.constant 0 : index
    %8 = vector.load %arg5[%c0_7, %c0_8] : memref<2x128xf32, #tpu.memory_space<vmem>>, vector<1x128xf32>
    %9 = vector.broadcast %8 : vector<1x128xf32> to vector<16x128xf32>
    %10 = arith.addf %7, %9 : vector<16x128xf32>
    %cst_9 = arith.constant 0.000000e+00 : f32
    %11 = vector.broadcast %cst_9 : f32 to vector<16x128xf32>
    %12 = arith.maximumf %10, %11 : vector<16x128xf32>
    %c0_10 = arith.constant 0 : index
    %c0_11 = arith.constant 0 : index
    %13 = vector.load %arg4[%c0_10, %c0_11] : memref<128x128xbf16, #tpu.memory_space<vmem>>, vector<128x128xbf16>
    %14 = arith.truncf %12 : vector<16x128xf32> to vector<16x128xbf16>
    %cst_12 = arith.constant dense<0.000000e+00> : vector<16x128xf32>
    %15 = tpu.matmul %14, %13, %cst_12 {dimension_numbers = #tpu.dot_dimension_numbers<[1], [0], [0], [1], [0, 0, 1, 1], [], []>} : vector<16x128xbf16>, vector<128x128xbf16>, vector<16x128xf32> -> vector<16x128xf32>
    %c1 = arith.constant 1 : index
    %c0_13 = arith.constant 0 : index
    %16 = vector.load %arg5[%c1, %c0_13] : memref<2x128xf32, #tpu.memory_space<vmem>>, vector<1x128xf32>
    %17 = vector.broadcast %16 : vector<1x128xf32> to vector<16x128xf32>
    %18 = arith.addf %15, %17 : vector<16x128xf32>
    %cst_14 = arith.constant 0.000000e+00 : f32
    %19 = vector.broadcast %cst_14 : f32 to vector<16x128xf32>
    %20 = arith.maximumf %18, %19 : vector<16x128xf32>
    %c0_15 = arith.constant 0 : index
    %c0_16 = arith.constant 0 : index
    %21 = vector.load %arg6[%c0_15, %c0_16] : memref<128x128xbf16, #tpu.memory_space<vmem>>, vector<128x128xbf16>
    %22 = arith.truncf %20 : vector<16x128xf32> to vector<16x128xbf16>
    %cst_17 = arith.constant dense<0.000000e+00> : vector<16x128xf32>
    %23 = tpu.matmul %22, %21, %cst_17 {dimension_numbers = #tpu.dot_dimension_numbers<[1], [0], [0], [1], [0, 0, 1, 1], [], []>} : vector<16x128xbf16>, vector<128x128xbf16>, vector<16x128xf32> -> vector<16x128xf32>
    %c0_18 = arith.constant 0 : index
    %c0_19 = arith.constant 0 : index
    %24 = vector.load %arg7[%c0_18, %c0_19] : memref<1x128xf32, #tpu.memory_space<vmem>>, vector<1x128xf32>
    %25 = vector.broadcast %24 : vector<1x128xf32> to vector<16x128xf32>
    %26 = arith.addf %23, %25 : vector<16x128xf32>
    %cst_20 = arith.constant dense<0xFF800000> : vector<16xf32>
    %27 = vector.multi_reduction <maximumf>, %26, %cst_20 [1] : vector<16x128xf32> to vector<16xf32>
    %28 = vector.shape_cast %27 : vector<16xf32> to vector<16x1xf32>
    %29 = vector.broadcast %28 : vector<16x1xf32> to vector<16x128xf32>
    %30 = arith.subf %26, %29 : vector<16x128xf32>
    %31 = math.exp %30 : vector<16x128xf32>
    %cst_21 = arith.constant dense<0.000000e+00> : vector<16xf32>
    %32 = vector.multi_reduction <add>, %31, %cst_21 [1] : vector<16x128xf32> to vector<16xf32>
    %33 = vector.shape_cast %32 : vector<16xf32> to vector<16x1xf32>
    %34 = tpu.reciprocal %33 {approx = true} : vector<16x1xf32> -> vector<16x1xf32>
    %35 = vector.broadcast %34 : vector<16x1xf32> to vector<16x128xf32>
    %36 = arith.mulf %31, %35 : vector<16x128xf32>
    %c0_22 = arith.constant 0 : index
    %c0_23 = arith.constant 0 : index
    %37 = memref.load %arg8[%c0_22, %c0_23] : memref<1x1xf32, #tpu.memory_space<smem>>
    %38 = vector.broadcast %37 : f32 to vector<16x128xf32>
    %39 = arith.mulf %36, %38 : vector<16x128xf32>
    %c0_24 = arith.constant 0 : index
    %c0_25 = arith.constant 0 : index
    %40 = vector.load %arg9[%c0_24, %c0_25] : memref<16x128xf32, #tpu.memory_space<vmem>>, vector<16x128xf32>
    tpu.vector_store %arg9[%c0_24, %c0_25], %39 {strides = array<i32>} : memref<16x128xf32, #tpu.memory_space<vmem>>, vector<16x128xf32>,
    return
  }
  func.func @transform_0(%arg0: i32) -> (i32, i32) {
    %c0_i32 = arith.constant 0 : i32
    %c0_i32_0 = arith.constant 0 : i32
    return %arg0, %c0_i32 : i32, i32
  }
  func.func @transform_1(%arg0: i32) -> (i32, i32) {
    %c0_i32 = arith.constant 0 : i32
    %c0_i32_0 = arith.constant 0 : i32
    %c0_i32_1 = arith.constant 0 : i32
    return %c0_i32, %c0_i32_0 : i32, i32
  }
  func.func @transform_2(%arg0: i32) -> (i32, i32) {
    %c0_i32 = arith.constant 0 : i32
    %c0_i32_0 = arith.constant 0 : i32
    %c0_i32_1 = arith.constant 0 : i32
    return %c0_i32, %c0_i32_0 : i32, i32
  }
  func.func @transform_3(%arg0: i32) -> (i32, i32) {
    %c0_i32 = arith.constant 0 : i32
    %c0_i32_0 = arith.constant 0 : i32
    %c0_i32_1 = arith.constant 0 : i32
    return %c0_i32, %c0_i32_0 : i32, i32
  }
  func.func @transform_4(%arg0: i32) -> (i32, i32) {
    %c0_i32 = arith.constant 0 : i32
    %c0_i32_0 = arith.constant 0 : i32
    %c0_i32_1 = arith.constant 0 : i32
    return %c0_i32, %c0_i32_0 : i32, i32
  }
  func.func @transform_5(%arg0: i32) -> (i32, i32) {
    %c0_i32 = arith.constant 0 : i32
    %c0_i32_0 = arith.constant 0 : i32
    %c0_i32_1 = arith.constant 0 : i32
    return %c0_i32, %c0_i32_0 : i32, i32
  }
  func.func @transform_6(%arg0: i32) -> (i32, i32) {
    %c0_i32 = arith.constant 0 : i32
    %c0_i32_0 = arith.constant 0 : i32
    %c0_i32_1 = arith.constant 0 : i32
    return %c0_i32, %c0_i32_0 : i32, i32
  }
  func.func @transform_7(%arg0: i32) -> (i32, i32) {
    %c0_i32 = arith.constant 0 : i32
    %c0_i32_0 = arith.constant 0 : i32
    %c0_i32_1 = arith.constant 0 : i32
    return %c0_i32, %c0_i32_0 : i32, i32
  }
  func.func @transform_8(%arg0: i32) -> (i32, i32) {
    %c0_i32 = arith.constant 0 : i32
    %c0_i32_0 = arith.constant 0 : i32
    return %arg0, %c0_i32 : i32, i32
  }
}

</mosaic_0001>

<llo_original>
// kernel: tpu_custom_call.1
$region0: #{tpu_custom_call.1}
  #allocation0 [shape = 'u32[]', space=smem, size = 0x4, offset = 0x4, fixed_abs, tag = 'smem constant byte address 0x4 - core index']
  #allocation1 [shape = 'u32[144,128]{1,0:T(1,128)}', space=vmem, size = 0x12000, scoped, tag = 'internal scratch']
  #allocation2 [shape = 'f32[1,1]{1,0:T(1,128)S(6)}', space=smem, size = 0x200, scoped, tag = 'scoped memory for tpu_custom_call.1']
  %s0 = inlined_call_operand.hbm [shape: bf16[16,32], index: 0, kind: input, shape index: {}]
  %s1 = inlined_call_operand.hbm [shape: bf16[32,128], index: 1, kind: input, shape index: {}]
  %s2 = inlined_call_operand.hbm [shape: bf16[128,128], index: 2, kind: input, shape index: {}]
  %s3 = inlined_call_operand.hbm [shape: bf16[128,128], index: 3, kind: input, shape index: {}]
  %s4 = inlined_call_operand.vmem [shape: f32[2,128], index: 4, kind: input, shape index: {}]
  %s5 = inlined_call_operand.hbm [shape: bf16[128,128], index: 5, kind: input, shape index: {}]
  %s6 = inlined_call_operand.vmem [shape: f32[1,128], index: 6, kind: input, shape index: {}]
  %s7 = inlined_call_operand.<no memory space> [shape: f32[1,1], index: 7, kind: input, shape index: {}]
  %s8 = inlined_call_operand.hbm [shape: f32[16,128], index: 8, kind: output, shape index: {}]
  %s9 = sld [smem:[#allocation0]]
  $region62: #{tpu_custom_call.1} parent=0
    _
  %s11 = ssub.s32 1, %s9
  %s12 = scalar_select 0, %s11, %s9
  %13 = sst [smem:[#allocation2]] %s7
  $region1: #{tpu_custom_call.1} parent=0
    #allocation3 [shape = 'u8[4096]{0}', space=vmem, size = 0x1000, scoped, tag = 'input window, operand 0, single buffered']
    #allocation4 [shape = 's32[1]{0}', space=sflag, size = 0x4, scoped, tag = 'scoped memory for tpu_custom_call.1']
    #allocation5 [shape = 's32[1]{0}', space=sflag, size = 0x4, scoped, tag = 'scoped memory for tpu_custom_call.1']
    #allocation6 [shape = 'u8[8192]{0}', space=vmem, size = 0x2000, scoped, tag = 'input window, operand 1, single buffered']
    #allocation7 [shape = 's32[1]{0}', space=sflag, size = 0x4, scoped, tag = 'scoped memory for tpu_custom_call.1']
    #allocation8 [shape = 'u8[32768]{0}', space=vmem, size = 0x8000, scoped, tag = 'input window, operand 2, single buffered']
    #allocation9 [shape = 'u8[32768]{0}', space=vmem, size = 0x8000, scoped, tag = 'input window, operand 3, single buffered']
    #allocation10 [shape = 's32[1]{0}', space=sflag, size = 0x4, scoped, tag = 'scoped memory for tpu_custom_call.1']
    #allocation11 [shape = 'u8[32768]{0}', space=vmem, size = 0x8000, scoped, tag = 'input window, operand 5, single buffered']
    #allocation12 [shape = 'u8[8192]{0}', space=vmem, size = 0x2000, scoped, tag = 'output window, operand 0, single buffered']
    %14 = vsyncpa [#allocation4], 0
    %15 = vsyncpa [#allocation7], 0
    %16 = vsyncpa [#allocation10], 0
    %17 = vsyncpa [#allocation5], 0
    // Predicated region
    $region2: #{tpu_custom_call.1} parent=1 // pred_check
      _
    $region3: #{tpu_custom_call.1} parent=1 // pred_check_branch
      %19 = sbr.rel (0) target = $region5
    $region4: #{tpu_custom_call.1} parent=1 // pred_region
      %s21 = ssub.s32 128, 128
      %22 = vsyncadd [#allocation4], %s21
      %s23 = sshll.u32 [#allocation3], 4
      %s24 = int_to_ptr.vmem [resolvable:$true] %s23
      %29 = dma.hbm_to_vmem [thread:$0]  %s0, 128, %s24, [#allocation4], 64, 64, 4
    $region5: #{tpu_custom_call.1} parent=1 // pred_fallthru
      _
    // Predicated region
    $region6: #{tpu_custom_call.1} parent=1 // pred_check
      _
    $region7: #{tpu_custom_call.1} parent=1 // pred_check_branch
      %31 = sbr.rel (0) target = $region9
    $region8: #{tpu_custom_call.1} parent=1 // pred_region
      %s33 = ssub.s32 256, 256
      %34 = vsyncadd [#allocation7], %s33
      %s35 = sshll.u32 [#allocation6], 4
      %s36 = int_to_ptr.vmem [resolvable:$true] %s35
      %41 = dma.hbm_to_vmem [thread:$0]  %s1, 256, %s36, [#allocation7], 64, 64, 4
    $region9: #{tpu_custom_call.1} parent=1 // pred_fallthru
      _
    // Predicated region
    $region10: #{tpu_custom_call.1} parent=1 // pred_check
      _
    $region11: #{tpu_custom_call.1} parent=1 // pred_check_branch
      %43 = sbr.rel (0) target = $region13
    $region12: #{tpu_custom_call.1} parent=1 // pred_region
      %s45 = ssub.s32 1024, 1024
      %46 = vsyncadd [#allocation7], %s45
      %s47 = sshll.u32 [#allocation8], 4
      %s48 = int_to_ptr.vmem [resolvable:$true] %s47
      %53 = dma.hbm_to_vmem [thread:$0]  %s2, 1024, %s48, [#allocation7], 64, 64, 4
    $region13: #{tpu_custom_call.1} parent=1 // pred_fallthru
      _
    // Predicated region
    $region14: #{tpu_custom_call.1} parent=1 // pred_check
      _
    $region15: #{tpu_custom_call.1} parent=1 // pred_check_branch
      %55 = sbr.rel (0) target = $region17
    $region16: #{tpu_custom_call.1} parent=1 // pred_region
      %s57 = ssub.s32 1024, 1024
      %58 = vsyncadd [#allocation10], %s57
      %s59 = sshll.u32 [#allocation9], 4
      %s60 = int_to_ptr.vmem [resolvable:$true] %s59
      %65 = dma.hbm_to_vmem [thread:$0]  %s3, 1024, %s60, [#allocation10], 64, 64, 4
    $region17: #{tpu_custom_call.1} parent=1 // pred_fallthru
      _
    // Predicated region
    $region18: #{tpu_custom_call.1} parent=1 // pred_check
      _
    $region19: #{tpu_custom_call.1} parent=1 // pred_check_branch
      %67 = sbr.rel (0) target = $region21
    $region20: #{tpu_custom_call.1} parent=1 // pred_region
      _
    $region21: #{tpu_custom_call.1} parent=1 // pred_fallthru
      _
    // Predicated region
    $region22: #{tpu_custom_call.1} parent=1 // pred_check
      _
    $region23: #{tpu_custom_call.1} parent=1 // pred_check_branch
      %69 = sbr.rel (0) target = $region25
    $region24: #{tpu_custom_call.1} parent=1 // pred_region
      %s71 = ssub.s32 1024, 1024
      %72 = vsyncadd [#allocation10], %s71
      %s73 = sshll.u32 [#allocation11], 4
      %s74 = int_to_ptr.vmem [resolvable:$true] %s73
      %79 = dma.hbm_to_vmem [thread:$0]  %s5, 1024, %s74, [#allocation10], 64, 64, 4
    $region25: #{tpu_custom_call.1} parent=1 // pred_fallthru
      _
    // Predicated region
    $region26: #{tpu_custom_call.1} parent=1 // pred_check
      _
    $region27: #{tpu_custom_call.1} parent=1 // pred_check_branch
      %81 = sbr.rel (0) target = $region29
    $region28: #{tpu_custom_call.1} parent=1 // pred_region
      _
    $region29: #{tpu_custom_call.1} parent=1 // pred_fallthru
      _
    // Predicated region
    $region30: #{tpu_custom_call.1} parent=1 // pred_check
      _
    $region31: #{tpu_custom_call.1} parent=1 // pred_check_branch
      %83 = sbr.rel (0) target = $region33
    $region32: #{tpu_custom_call.1} parent=1 // pred_region
      _
    $region33: #{tpu_custom_call.1} parent=1 // pred_fallthru
      _
    // Predicated region
    $region34: #{tpu_custom_call.1} parent=1 // pred_check
      _
    $region35: #{tpu_custom_call.1} parent=1 // pred_check_branch
      %85 = sbr.rel (0) target = $region37
    $region36: #{tpu_custom_call.1} parent=1 // pred_region
      %86 = dma.done [#allocation4], 128
    $region37: #{tpu_custom_call.1} parent=1 // pred_fallthru
      _
    // Predicated region
    $region38: #{tpu_custom_call.1} parent=1 // pred_check
      _
    $region39: #{tpu_custom_call.1} parent=1 // pred_check_branch
      %88 = sbr.rel (0) target = $region41
    $region40: #{tpu_custom_call.1} parent=1 // pred_region
      %89 = dma.done [#allocation7], 256
    $region41: #{tpu_custom_call.1} parent=1 // pred_fallthru
      _
    // Predicated region
    $region42: #{tpu_custom_call.1} parent=1 // pred_check
      _
    $region43: #{tpu_custom_call.1} parent=1 // pred_check_branch
      %91 = sbr.rel (0) target = $region45
    $region44: #{tpu_custom_call.1} parent=1 // pred_region
      %92 = dma.done [#allocation7], 1024
    $region45: #{tpu_custom_call.1} parent=1 // pred_fallthru
      _
    // Predicated region
    $region46: #{tpu_custom_call.1} parent=1 // pred_check
      _
    $region47: #{tpu_custom_call.1} parent=1 // pred_check_branch
      %94 = sbr.rel (0) target = $region49
    $region48: #{tpu_custom_call.1} parent=1 // pred_region
      %95 = dma.done [#allocation10], 1024
    $region49: #{tpu_custom_call.1} parent=1 // pred_fallthru
      _
    // Predicated region
    $region50: #{tpu_custom_call.1} parent=1 // pred_check
      _
    $region51: #{tpu_custom_call.1} parent=1 // pred_check_branch
      %97 = sbr.rel (0) target = $region53
    $region52: #{tpu_custom_call.1} parent=1 // pred_region
      %98 = dma.done [#allocation10], 1024
    $region53: #{tpu_custom_call.1} parent=1 // pred_fallthru
      _
    %v100 = vld [vmem:[#allocation3] sm:$0xf]
    %v101 = vld [vmem:[#allocation3 + $0x4] sm:$0xf]
    %v102 = vld [vmem:[#allocation6] sm:$0xf]
    %v103 = vld [vmem:[#allocation6 + $0x4] sm:$0xf]
    %v104 = vld [vmem:[#allocation6 + $0x8] sm:$0xf]
    %v105 = vld [vmem:[#allocation6 + $0xc] sm:$0xf]
    %v108 = vunpack.c.l.b16 %v100
    %v109 = vunpack.c.l.b16 %v101
    %v110 = vpack.c.b16 %v109, %v108
    %v115 = vunpack.c.l.b16 %v102
    %v116 = vunpack.c.l.b16 %v103
    %v117 = vunpack.c.l.b16 %v104
    %v118 = vunpack.c.l.b16 %v105
    %v119 = vpack.c.b16 %v116, %v115
    %v120 = vpack.c.b16 %v118, %v117
    %vm123 = vcmask 261120
    %v125 = vsel %vm123, %v110, 0
    %127 = vmatprep.subr.bf16.mxu0 0
    %128 = vmatpush1.bf16.msra.mxu0 0
    %129 = vmatprep.subr.bf16.mxu0 0
    %130 = vmatpush1.bf16.msra.mxu0 0
    %131 = vmatprep.subr.bf16.mxu0 0
    %132 = vmatpush1.bf16.msra.mxu0 0
    %133 = vmatprep.subr.bf16.mxu0 0
    %134 = vmatpush1.bf16.msra.mxu0 0
    %135 = vmatprep.subr.bf16.mxu0 0
    %136 = vmatpush1.bf16.msra.mxu0 0
    %137 = vmatprep.subr.bf16.mxu0 0
    %138 = vmatpush1.bf16.msra.mxu0 0
    %139 = vmatprep.subr.bf16.mxu0 0
    %140 = vmatpush1.bf16.msra.mxu0 %v120
    %141 = vmatprep.subr.bf16.mxu0 0
    %142 = vmatpush1.bf16.msra.mxu0 %v119
    %143 = vmatprep.subr.bf16.mxu0 0
    %144 = vmatpush2.bf16.msra.mxu0 0
    %145 = vmatprep.subr.bf16.mxu0 0
    %146 = vmatpush2.bf16.msra.mxu0 0
    %147 = vmatprep.subr.bf16.mxu0 0
    %148 = vmatpush2.bf16.msra.mxu0 0
    %149 = vmatprep.subr.bf16.mxu0 0
    %150 = vmatpush2.bf16.msra.mxu0 0
    %151 = vmatprep.subr.bf16.mxu0 0
    %152 = vmatpush2.bf16.msra.mxu0 0
    %153 = vmatprep.subr.bf16.mxu0 0
    %154 = vmatpush2.bf16.msra.mxu0 0
    %155 = vmatprep.subr.bf16.mxu0 0
    %156 = vmatpush2.bf16.msra.mxu0 0
    %157 = vmatprep.subr.bf16.mxu0 0
    %158 = vmatpush2.bf16.msra.mxu0 0
    %159 = vmatprep.mubr.bf16.mxu0 0
    %160 = vmatmul.mubr.bf16.gmra.mxu0 %v125
    %v161 = vpop.f32.mrf.mxu0
    %v162 = vadd.f32 0.0, %v161
    %v163 = vpop.f32.mrf.mxu0
    %v164 = vpop.f32.mrf.mxu0
    %v165 = vadd.f32 0.0, %v164
    %v166 = vpop.f32.mrf.mxu0
    %167 = vdwg.mxu0
    %v168 = vmax.f32 %v162, 0.0
    %v169 = vmax.f32 %v165, 0.0
    %v170 = vld [vmem:[#allocation8] sm:$0xf]
    %v171 = vld [vmem:[#allocation8 + $0x4] sm:$0xf]
    %v172 = vld [vmem:[#allocation8 + $0x8] sm:$0xf]
    %v173 = vld [vmem:[#allocation8 + $0xc] sm:$0xf]
    %v174 = vld [vmem:[#allocation8 + $0x10] sm:$0xf]
    %v175 = vld [vmem:[#allocation8 + $0x14] sm:$0xf]
    %v176 = vld [vmem:[#allocation8 + $0x18] sm:$0xf]
    %v177 = vld [vmem:[#allocation8 + $0x1c] sm:$0xf]
    %v178 = vld [vmem:[#allocation8 + $0x20] sm:$0xf]
    %v179 = vld [vmem:[#allocation8 + $0x24] sm:$0xf]
    %v180 = vld [vmem:[#allocation8 + $0x28] sm:$0xf]
    %v181 = vld [vmem:[#allocation8 + $0x2c] sm:$0xf]
    %v182 = vld [vmem:[#allocation8 + $0x30] sm:$0xf]
    %v183 = vld [vmem:[#allocation8 + $0x34] sm:$0xf]
    %v184 = vld [vmem:[#allocation8 + $0x38] sm:$0xf]
    %v185 = vld [vmem:[#allocation8 + $0x3c] sm:$0xf]
    %v186 = vpack.c.bf16 %v169, %v168
    %v187 = vld [vmem:[%s4] sm:$0x1]
    %v188 = vlaneseq
    %v189 = vshrl.u32 %v188, 7
    %v190 = vsub.s32 0, %v189
    %v191 = vrot.slane %v187, %v190
    %v208 = vunpack.c.l.b16 %v170
    %v209 = vunpack.c.l.b16 %v171
    %v210 = vunpack.c.l.b16 %v172
    %v211 = vunpack.c.l.b16 %v173
    %v212 = vunpack.c.l.b16 %v174
    %v213 = vunpack.c.l.b16 %v175
    %v214 = vunpack.c.l.b16 %v176
    %v215 = vunpack.c.l.b16 %v177
    %v216 = vunpack.c.l.b16 %v178
    %v217 = vunpack.c.l.b16 %v179
    %v218 = vunpack.c.l.b16 %v180
    %v219 = vunpack.c.l.b16 %v181
    %v220 = vunpack.c.l.b16 %v182
    %v221 = vunpack.c.l.b16 %v183
    %v222 = vunpack.c.l.b16 %v184
    %v223 = vunpack.c.l.b16 %v185
    %v224 = vpack.c.b16 %v209, %v208
    %v225 = vpack.c.b16 %v211, %v210
    %v226 = vpack.c.b16 %v213, %v212
    %v227 = vpack.c.b16 %v215, %v214
    %v228 = vpack.c.b16 %v217, %v216
    %v229 = vpack.c.b16 %v219, %v218
    %v230 = vpack.c.b16 %v221, %v220
    %v231 = vpack.c.b16 %v223, %v222
    %240 = vmatprep.subr.bf16.mxu0 0
    %241 = vmatpush1.bf16.msra.mxu0 %v231
    %242 = vmatprep.subr.bf16.mxu0 0
    %243 = vmatpush1.bf16.msra.mxu0 %v230
    %244 = vmatprep.subr.bf16.mxu0 0
    %245 = vmatpush1.bf16.msra.mxu0 %v229
    %246 = vmatprep.subr.bf16.mxu0 0
    %247 = vmatpush1.bf16.msra.mxu0 %v228
    %248 = vmatprep.subr.bf16.mxu0 0
    %249 = vmatpush1.bf16.msra.mxu0 %v227
    %250 = vmatprep.subr.bf16.mxu0 0
    %251 = vmatpush1.bf16.msra.mxu0 %v226
    %252 = vmatprep.subr.bf16.mxu0 0
    %253 = vmatpush1.bf16.msra.mxu0 %v225
    %254 = vmatprep.subr.bf16.mxu0 0
    %255 = vmatpush1.bf16.msra.mxu0 %v224
    %256 = vmatprep.subr.bf16.mxu0 0
    %257 = vmatpush2.bf16.msra.mxu0 0
    %258 = vmatprep.subr.bf16.mxu0 0
    %259 = vmatpush2.bf16.msra.mxu0 0
    %260 = vmatprep.subr.bf16.mxu0 0
    %261 = vmatpush2.bf16.msra.mxu0 0
    %262 = vmatprep.subr.bf16.mxu0 0
    %263 = vmatpush2.bf16.msra.mxu0 0
    %264 = vmatprep.subr.bf16.mxu0 0
    %265 = vmatpush2.bf16.msra.mxu0 0
    %266 = vmatprep.subr.bf16.mxu0 0
    %267 = vmatpush2.bf16.msra.mxu0 0
    %268 = vmatprep.subr.bf16.mxu0 0
    %269 = vmatpush2.bf16.msra.mxu0 0
    %270 = vmatprep.subr.bf16.mxu0 0
    %271 = vmatpush2.bf16.msra.mxu0 0
    %272 = vmatprep.mubr.bf16.mxu0 0
    %273 = vmatmul.mubr.bf16.gmra.mxu0 %v186
    %v274 = vpop.f32.mrf.mxu0
    %v275 = vadd.f32 %v191, %v274
    %v276 = vpop.f32.mrf.mxu0
    %v277 = vpop.f32.mrf.mxu0
    %v278 = vadd.f32 %v191, %v277
    %v279 = vpop.f32.mrf.mxu0
    %280 = vdwg.mxu0
    %v281 = vmax.f32 %v275, 0.0
    %v282 = vmax.f32 %v278, 0.0
    %v283 = vld [vmem:[#allocation9] sm:$0xf]
    %v284 = vld [vmem:[#allocation9 + $0x4] sm:$0xf]
    %v285 = vld [vmem:[#allocation9 + $0x8] sm:$0xf]
    %v286 = vld [vmem:[#allocation9 + $0xc] sm:$0xf]
    %v287 = vld [vmem:[#allocation9 + $0x10] sm:$0xf]
    %v288 = vld [vmem:[#allocation9 + $0x14] sm:$0xf]
    %v289 = vld [vmem:[#allocation9 + $0x18] sm:$0xf]
    %v290 = vld [vmem:[#allocation9 + $0x1c] sm:$0xf]
    %v291 = vld [vmem:[#allocation9 + $0x20] sm:$0xf]
    %v292 = vld [vmem:[#allocation9 + $0x24] sm:$0xf]
    %v293 = vld [vmem:[#allocation9 + $0x28] sm:$0xf]
    %v294 = vld [vmem:[#allocation9 + $0x2c] sm:$0xf]
    %v295 = vld [vmem:[#allocation9 + $0x30] sm:$0xf]
    %v296 = vld [vmem:[#allocation9 + $0x34] sm:$0xf]
    %v297 = vld [vmem:[#allocation9 + $0x38] sm:$0xf]
    %v298 = vld [vmem:[#allocation9 + $0x3c] sm:$0xf]
    %v299 = vpack.c.bf16 %v282, %v281
    %v300 = vld [vmem:[%s4 + $0x1] sm:$0x1]
    %v301 = vlaneseq
    %v302 = vshrl.u32 %v301, 7
    %v303 = vsub.s32 0, %v302
    %v304 = vrot.slane %v300, %v303
    %v321 = vunpack.c.l.b16 %v283
    %v322 = vunpack.c.l.b16 %v284
    %v323 = vunpack.c.l.b16 %v285
    %v324 = vunpack.c.l.b16 %v286
    %v325 = vunpack.c.l.b16 %v287
    %v326 = vunpack.c.l.b16 %v288
    %v327 = vunpack.c.l.b16 %v289
    %v328 = vunpack.c.l.b16 %v290
    %v329 = vunpack.c.l.b16 %v291
    %v330 = vunpack.c.l.b16 %v292
    %v331 = vunpack.c.l.b16 %v293
    %v332 = vunpack.c.l.b16 %v294
    %v333 = vunpack.c.l.b16 %v295
    %v334 = vunpack.c.l.b16 %v296
    %v335 = vunpack.c.l.b16 %v297
    %v336 = vunpack.c.l.b16 %v298
    %v337 = vpack.c.b16 %v322, %v321
    %v338 = vpack.c.b16 %v324, %v323
    %v339 = vpack.c.b16 %v326, %v325
    %v340 = vpack.c.b16 %v328, %v327
    %v341 = vpack.c.b16 %v330, %v329
    %v342 = vpack.c.b16 %v332, %v331
    %v343 = vpack.c.b16 %v334, %v333
    %v344 = vpack.c.b16 %v336, %v335
    %353 = vmatprep.subr.bf16.mxu0 0
    %354 = vmatpush1.bf16.msra.mxu0 %v344
    %355 = vmatprep.subr.bf16.mxu0 0
    %356 = vmatpush1.bf16.msra.mxu0 %v343
    %357 = vmatprep.subr.bf16.mxu0 0
    %358 = vmatpush1.bf16.msra.mxu0 %v342
    %359 = vmatprep.subr.bf16.mxu0 0
    %360 = vmatpush1.bf16.msra.mxu0 %v341
    %361 = vmatprep.subr.bf16.mxu0 0
    %362 = vmatpush1.bf16.msra.mxu0 %v340
    %363 = vmatprep.subr.bf16.mxu0 0
    %364 = vmatpush1.bf16.msra.mxu0 %v339
    %365 = vmatprep.subr.bf16.mxu0 0
    %366 = vmatpush1.bf16.msra.mxu0 %v338
    %367 = vmatprep.subr.bf16.mxu0 0
    %368 = vmatpush1.bf16.msra.mxu0 %v337
    %369 = vmatprep.subr.bf16.mxu0 0
    %370 = vmatpush2.bf16.msra.mxu0 0
    %371 = vmatprep.subr.bf16.mxu0 0
    %372 = vmatpush2.bf16.msra.mxu0 0
    %373 = vmatprep.subr.bf16.mxu0 0
    %374 = vmatpush2.bf16.msra.mxu0 0
    %375 = vmatprep.subr.bf16.mxu0 0
    %376 = vmatpush2.bf16.msra.mxu0 0
    %377 = vmatprep.subr.bf16.mxu0 0
    %378 = vmatpush2.bf16.msra.mxu0 0
    %379 = vmatprep.subr.bf16.mxu0 0
    %380 = vmatpush2.bf16.msra.mxu0 0
    %381 = vmatprep.subr.bf16.mxu0 0
    %382 = vmatpush2.bf16.msra.mxu0 0
    %383 = vmatprep.subr.bf16.mxu0 0
    %384 = vmatpush2.bf16.msra.mxu0 0
    %385 = vmatprep.mubr.bf16.mxu0 0
    %386 = vmatmul.mubr.bf16.gmra.mxu0 %v299
    %v387 = vpop.f32.mrf.mxu0
    %v388 = vadd.f32 %v304, %v387
    %v389 = vpop.f32.mrf.mxu0
    %v390 = vpop.f32.mrf.mxu0
    %v391 = vadd.f32 %v304, %v390
    %v392 = vpop.f32.mrf.mxu0
    %393 = vdwg.mxu0
    %v394 = vmax.f32 %v388, 0.0
    %v395 = vmax.f32 %v391, 0.0
    %v396 = vld [vmem:[#allocation11] sm:$0xf]
    %v397 = vld [vmem:[#allocation11 + $0x4] sm:$0xf]
    %v398 = vld [vmem:[#allocation11 + $0x8] sm:$0xf]
    %v399 = vld [vmem:[#allocation11 + $0xc] sm:$0xf]
    %v400 = vld [vmem:[#allocation11 + $0x10] sm:$0xf]
    %v401 = vld [vmem:[#allocation11 + $0x14] sm:$0xf]
    %v402 = vld [vmem:[#allocation11 + $0x18] sm:$0xf]
    %v403 = vld [vmem:[#allocation11 + $0x1c] sm:$0xf]
    %v404 = vld [vmem:[#allocation11 + $0x20] sm:$0xf]
    %v405 = vld [vmem:[#allocation11 + $0x24] sm:$0xf]
    %v406 = vld [vmem:[#allocation11 + $0x28] sm:$0xf]
    %v407 = vld [vmem:[#allocation11 + $0x2c] sm:$0xf]
    %v408 = vld [vmem:[#allocation11 + $0x30] sm:$0xf]
    %v409 = vld [vmem:[#allocation11 + $0x34] sm:$0xf]
    %v410 = vld [vmem:[#allocation11 + $0x38] sm:$0xf]
    %v411 = vld [vmem:[#allocation11 + $0x3c] sm:$0xf]
    %v412 = vpack.c.bf16 %v395, %v394
    %v413 = vld [vmem:[%s6] sm:$0x1]
    %v415 = vlaneseq
    %v416 = vshrl.u32 %v415, 7
    %v417 = vsub.s32 0, %v416
    %v418 = vrot.slane %v413, %v417
    %v436 = vunpack.c.l.b16 %v396
    %v437 = vunpack.c.l.b16 %v397
    %v438 = vunpack.c.l.b16 %v398
    %v439 = vunpack.c.l.b16 %v399
    %v440 = vunpack.c.l.b16 %v400
    %v441 = vunpack.c.l.b16 %v401
    %v442 = vunpack.c.l.b16 %v402
    %v443 = vunpack.c.l.b16 %v403
    %v444 = vunpack.c.l.b16 %v404
    %v445 = vunpack.c.l.b16 %v405
    %v446 = vunpack.c.l.b16 %v406
    %v447 = vunpack.c.l.b16 %v407
    %v448 = vunpack.c.l.b16 %v408
    %v449 = vunpack.c.l.b16 %v409
    %v450 = vunpack.c.l.b16 %v410
    %v451 = vunpack.c.l.b16 %v411
    %v452 = vpack.c.b16 %v437, %v436
    %v453 = vpack.c.b16 %v439, %v438
    %v454 = vpack.c.b16 %v441, %v440
    %v455 = vpack.c.b16 %v443, %v442
    %v456 = vpack.c.b16 %v445, %v444
    %v457 = vpack.c.b16 %v447, %v446
    %v458 = vpack.c.b16 %v449, %v448
    %v459 = vpack.c.b16 %v451, %v450
    %468 = vmatprep.subr.bf16.mxu0 0
    %469 = vmatpush1.bf16.msra.mxu0 %v459
    %470 = vmatprep.subr.bf16.mxu0 0
    %471 = vmatpush1.bf16.msra.mxu0 %v458
    %472 = vmatprep.subr.bf16.mxu0 0
    %473 = vmatpush1.bf16.msra.mxu0 %v457
    %474 = vmatprep.subr.bf16.mxu0 0
    %475 = vmatpush1.bf16.msra.mxu0 %v456
    %476 = vmatprep.subr.bf16.mxu0 0
    %477 = vmatpush1.bf16.msra.mxu0 %v455
    %478 = vmatprep.subr.bf16.mxu0 0
    %479 = vmatpush1.bf16.msra.mxu0 %v454
    %480 = vmatprep.subr.bf16.mxu0 0
    %481 = vmatpush1.bf16.msra.mxu0 %v453
    %482 = vmatprep.subr.bf16.mxu0 0
    %483 = vmatpush1.bf16.msra.mxu0 %v452
    %484 = vmatprep.subr.bf16.mxu0 0
    %485 = vmatpush2.bf16.msra.mxu0 0
    %486 = vmatprep.subr.bf16.mxu0 0
    %487 = vmatpush2.bf16.msra.mxu0 0
    %488 = vmatprep.subr.bf16.mxu0 0
    %489 = vmatpush2.bf16.msra.mxu0 0
    %490 = vmatprep.subr.bf16.mxu0 0
    %491 = vmatpush2.bf16.msra.mxu0 0
    %492 = vmatprep.subr.bf16.mxu0 0
    %493 = vmatpush2.bf16.msra.mxu0 0
    %494 = vmatprep.subr.bf16.mxu0 0
    %495 = vmatpush2.bf16.msra.mxu0 0
    %496 = vmatprep.subr.bf16.mxu0 0
    %497 = vmatpush2.bf16.msra.mxu0 0
    %498 = vmatprep.subr.bf16.mxu0 0
    %499 = vmatpush2.bf16.msra.mxu0 0
    %500 = vmatprep.mubr.bf16.mxu0 0
    %501 = vmatmul.mubr.bf16.gmra.mxu0 %v412
    %v502 = vpop.f32.mrf.mxu0
    %v503 = vadd.f32 %v418, %v502
    %v504 = vpop.f32.mrf.mxu0
    %v505 = vpop.f32.mrf.mxu0
    %v506 = vadd.f32 %v418, %v505
    %v507 = vpop.f32.mrf.mxu0
    %508 = vdwg.mxu0
    %509 = vmax.xlane.f32.xlu0 %v503
    %v510 = vpop.xlane.xlu0 %509
    %511 = vmax.xlane.f32.xlu0 %v506
    %v512 = vpop.xlane.xlu0 %511
    %v513 = vsub.f32 %v503, %v510
    %v514 = vsub.f32 %v506, %v512
    %v515 = vmul.f32 %v513, 1.442695
    %v516 = vpow.pop %v515
    %v517 = vmul.f32 %v514, 1.442695
    %v518 = vpow.pop %v517
    %519 = vadd.xlane.f32.xlu0 %v516
    %v520 = vpop.xlane.xlu0 %519
    %521 = vadd.xlane.f32.xlu0 %v518
    %v522 = vpop.xlane.xlu0 %521
    %v523 = vrcp.pop %v520
    %v524 = vrcp.pop %v522
    %v525 = vmul.f32 %v516, %v523
    %v526 = vmul.f32 %v518, %v524
    %s527 = sld [smem:[#allocation2]]
    %v528 = vstv %s527
    %v529 = vmul.f32 %v525, %v528
    %v530 = vmul.f32 %v526, %v528
    %531 = vst [vmem:[#allocation12] sm:$0xff] %v529
    %532 = vst [vmem:[#allocation12 + $0x8] sm:$0xff] %v530
    // Predicated region
    $region54: #{tpu_custom_call.1} parent=1 // pred_check
      _
    $region55: #{tpu_custom_call.1} parent=1 // pred_check_branch
      %534 = sbr.rel (0) target = $region57
    $region56: #{tpu_custom_call.1} parent=1 // pred_region
      %s536 = ssub.s32 256, 256
      %537 = vsyncadd [#allocation5], %s536
      %s538 = sshll.u32 [#allocation12], 4
      %s539 = int_to_ptr.vmem [resolvable:$true] %s538
      %544 = dma.vmem_to_hbm [thread:$0]  %s539, 256, %s8, [#allocation5], 128, 128, 8
    $region57: #{tpu_custom_call.1} parent=1 // pred_fallthru
      _
    // Predicated region
    $region58: #{tpu_custom_call.1} parent=1 // pred_check
      _
    $region59: #{tpu_custom_call.1} parent=1 // pred_check_branch
      %546 = sbr.rel (0) target = $region61
    $region60: #{tpu_custom_call.1} parent=1 // pred_region
      %547 = dma.done [#allocation5], 256
    $region61: #{tpu_custom_call.1} parent=1 // pred_fallthru
      _
    %548 = vsyncpa [#allocation4], 1
    %549 = vsyncpa [#allocation7], 1
    %550 = vsyncpa [#allocation10], 1
    %551 = vsyncpa [#allocation5], 1

// kernel: tpu_custom_call.1
$region0: #{tpu_custom_call.1}
  #allocation0 [shape = 'u32[]', space=smem, size = 0x4, offset = 0x4, fixed_abs, tag = 'smem constant byte address 0x4 - core index']
  #allocation1 [shape = 'u32[144,128]{1,0:T(1,128)}', space=vmem, size = 0x12000, scoped, tag = 'internal scratch']
  #allocation2 [shape = 'f32[1,1]{1,0:T(1,128)S(6)}', space=smem, size = 0x200, scoped, tag = 'scoped memory for tpu_custom_call.1']
  %s0 = inlined_call_operand.hbm [shape: bf16[16,32], index: 0, kind: input, shape index: {}]
  %s1 = inlined_call_operand.hbm [shape: bf16[32,128], index: 1, kind: input, shape index: {}]
  %s2 = inlined_call_operand.hbm [shape: bf16[128,128], index: 2, kind: input, shape index: {}]
  %s3 = inlined_call_operand.hbm [shape: bf16[128,128], index: 3, kind: input, shape index: {}]
  %s4 = inlined_call_operand.vmem [shape: f32[2,128], index: 4, kind: input, shape index: {}]
  %s5 = inlined_call_operand.hbm [shape: bf16[128,128], index: 5, kind: input, shape index: {}]
  %s6 = inlined_call_operand.vmem [shape: f32[1,128], index: 6, kind: input, shape index: {}]
  %s7 = inlined_call_operand.<no memory space> [shape: f32[1,1], index: 7, kind: input, shape index: {}]
  %s8 = inlined_call_operand.hbm [shape: f32[16,128], index: 8, kind: output, shape index: {}]
  %s9 = sld [smem:[#allocation0]]
  $region62: #{tpu_custom_call.1} parent=0
    _
  %s11 = ssub.s32 1, %s9
  %s12 = scalar_select 0, %s11, %s9
  %13 = sst [smem:[#allocation2]] %s7
  $region1: #{tpu_custom_call.1} parent=0
    #allocation3 [shape = 'u8[4096]{0}', space=vmem, size = 0x1000, scoped, tag = 'input window, operand 0, single buffered']
    #allocation4 [shape = 's32[1]{0}', space=sflag, size = 0x4, scoped, tag = 'scoped memory for tpu_custom_call.1']
    #allocation5 [shape = 's32[1]{0}', space=sflag, size = 0x4, scoped, tag = 'scoped memory for tpu_custom_call.1']
    #allocation6 [shape = 'u8[8192]{0}', space=vmem, size = 0x2000, scoped, tag = 'input window, operand 1, single buffered']
    #allocation7 [shape = 's32[1]{0}', space=sflag, size = 0x4, scoped, tag = 'scoped memory for tpu_custom_call.1']
    #allocation8 [shape = 'u8[32768]{0}', space=vmem, size = 0x8000, scoped, tag = 'input window, operand 2, single buffered']
    #allocation9 [shape = 'u8[32768]{0}', space=vmem, size = 0x8000, scoped, tag = 'input window, operand 3, single buffered']
    #allocation10 [shape = 's32[1]{0}', space=sflag, size = 0x4, scoped, tag = 'scoped memory for tpu_custom_call.1']
    #allocation11 [shape = 'u8[32768]{0}', space=vmem, size = 0x8000, scoped, tag = 'input window, operand 5, single buffered']
    #allocation12 [shape = 'u8[8192]{0}', space=vmem, size = 0x2000, scoped, tag = 'output window, operand 0, single buffered']
    %14 = vsyncpa [#allocation4], 0
    %15 = vsyncpa [#allocation7], 0
    %16 = vsyncpa [#allocation10], 0
    %17 = vsyncpa [#allocation5], 0
    // Predicated region
    $region2: #{tpu_custom_call.1} parent=1 // pred_check
      _
    $region3: #{tpu_custom_call.1} parent=1 // pred_check_branch
      %19 = sbr.rel (0) target = $region5
    $region4: #{tpu_custom_call.1} parent=1 // pred_region
      %s21 = ssub.s32 128, 128
      %22 = vsyncadd [#allocation4], %s21
      %s23 = sshll.u32 [#allocation3], 4
      %s24 = int_to_ptr.vmem [resolvable:$true] %s23
      %29 = dma.hbm_to_vmem [thread:$0]  %s0, 128, %s24, [#allocation4], 64, 64, 4
    $region5: #{tpu_custom_call.1} parent=1 // pred_fallthru
      _
    // Predicated region
    $region6: #{tpu_custom_call.1} parent=1 // pred_check
      _
    $region7: #{tpu_custom_call.1} parent=1 // pred_check_branch
      %31 = sbr.rel (0) target = $region9
    $region8: #{tpu_custom_call.1} parent=1 // pred_region
      %s33 = ssub.s32 256, 256
      %34 = vsyncadd [#allocation7], %s33
      %s35 = sshll.u32 [#allocation6], 4
      %s36 = int_to_ptr.vmem [resolvable:$true] %s35
      %41 = dma.hbm_to_vmem [thread:$0]  %s1, 256, %s36, [#allocation7], 64, 64, 4
    $region9: #{tpu_custom_call.1} parent=1 // pred_fallthru
      _
    // Predicated region
    $region10: #{tpu_custom_call.1} parent=1 // pred_check
      _
    $region11: #{tpu_custom_call.1} parent=1 // pred_check_branch
      %43 = sbr.rel (0) target = $region13
    $region12: #{tpu_custom_call.1} parent=1 // pred_region
      %s45 = ssub.s32 1024, 1024
      %46 = vsyncadd [#allocation7], %s45
      %s47 = sshll.u32 [#allocation8], 4
      %s48 = int_to_ptr.vmem [resolvable:$true] %s47
      %53 = dma.hbm_to_vmem [thread:$0]  %s2, 1024, %s48, [#allocation7], 64, 64, 4
    $region13: #{tpu_custom_call.1} parent=1 // pred_fallthru
      _
    // Predicated region
    $region14: #{tpu_custom_call.1} parent=1 // pred_check
      _
    $region15: #{tpu_custom_call.1} parent=1 // pred_check_branch
      %55 = sbr.rel (0) target = $region17
    $region16: #{tpu_custom_call.1} parent=1 // pred_region
      %s57 = ssub.s32 1024, 1024
      %58 = vsyncadd [#allocation10], %s57
      %s59 = sshll.u32 [#allocation9], 4
      %s60 = int_to_ptr.vmem [resolvable:$true] %s59
      %65 = dma.hbm_to_vmem [thread:$0]  %s3, 1024, %s60, [#allocation10], 64, 64, 4
    $region17: #{tpu_custom_call.1} parent=1 // pred_fallthru
      _
    // Predicated region
    $region18: #{tpu_custom_call.1} parent=1 // pred_check
      _
    $region19: #{tpu_custom_call.1} parent=1 // pred_check_branch
      %67 = sbr.rel (0) target = $region21
    $region20: #{tpu_custom_call.1} parent=1 // pred_region
      _
    $region21: #{tpu_custom_call.1} parent=1 // pred_fallthru
      _
    // Predicated region
    $region22: #{tpu_custom_call.1} parent=1 // pred_check
      _
    $region23: #{tpu_custom_call.1} parent=1 // pred_check_branch
      %69 = sbr.rel (0) target = $region25
    $region24: #{tpu_custom_call.1} parent=1 // pred_region
      %s71 = ssub.s32 1024, 1024
      %72 = vsyncadd [#allocation10], %s71
      %s73 = sshll.u32 [#allocation11], 4
      %s74 = int_to_ptr.vmem [resolvable:$true] %s73
      %79 = dma.hbm_to_vmem [thread:$0]  %s5, 1024, %s74, [#allocation10], 64, 64, 4
    $region25: #{tpu_custom_call.1} parent=1 // pred_fallthru
      _
    // Predicated region
    $region26: #{tpu_custom_call.1} parent=1 // pred_check
      _
    $region27: #{tpu_custom_call.1} parent=1 // pred_check_branch
      %81 = sbr.rel (0) target = $region29
    $region28: #{tpu_custom_call.1} parent=1 // pred_region
      _
    $region29: #{tpu_custom_call.1} parent=1 // pred_fallthru
      _
    // Predicated region
    $region30: #{tpu_custom_call.1} parent=1 // pred_check
      _
    $region31: #{tpu_custom_call.1} parent=1 // pred_check_branch
      %83 = sbr.rel (0) target = $region33
    $region32: #{tpu_custom_call.1} parent=1 // pred_region
      _
    $region33: #{tpu_custom_call.1} parent=1 // pred_fallthru
      _
    // Predicated region
    $region34: #{tpu_custom_call.1} parent=1 // pred_check
      _
    $region35: #{tpu_custom_call.1} parent=1 // pred_check_branch
      %85 = sbr.rel (0) target = $region37
    $region36: #{tpu_custom_call.1} parent=1 // pred_region
      %86 = dma.done [#allocation4], 128
    $region37: #{tpu_custom_call.1} parent=1 // pred_fallthru
      _
    // Predicated region
    $region38: #{tpu_custom_call.1} parent=1 // pred_check
      _
    $region39: #{tpu_custom_call.1} parent=1 // pred_check_branch
      %88 = sbr.rel (0) target = $region41
    $region40: #{tpu_custom_call.1} parent=1 // pred_region
      %89 = dma.done [#allocation7], 256
    $region41: #{tpu_custom_call.1} parent=1 // pred_fallthru
      _
    // Predicated region
    $region42: #{tpu_custom_call.1} parent=1 // pred_check
      _
    $region43: #{tpu_custom_call.1} parent=1 // pred_check_branch
      %91 = sbr.rel (0) target = $region45
    $region44: #{tpu_custom_call.1} parent=1 // pred_region
      %92 = dma.done [#allocation7], 1024
    $region45: #{tpu_custom_call.1} parent=1 // pred_fallthru
      _
    // Predicated region
    $region46: #{tpu_custom_call.1} parent=1 // pred_check
      _
    $region47: #{tpu_custom_call.1} parent=1 // pred_check_branch
      %94 = sbr.rel (0) target = $region49
    $region48: #{tpu_custom_call.1} parent=1 // pred_region
      %95 = dma.done [#allocation10], 1024
    $region49: #{tpu_custom_call.1} parent=1 // pred_fallthru
      _
    // Predicated region
    $region50: #{tpu_custom_call.1} parent=1 // pred_check
      _
    $region51: #{tpu_custom_call.1} parent=1 // pred_check_branch
      %97 = sbr.rel (0) target = $region53
    $region52: #{tpu_custom_call.1} parent=1 // pred_region
      %98 = dma.done [#allocation10], 1024
    $region53: #{tpu_custom_call.1} parent=1 // pred_fallthru
      _
    %v100 = vld [vmem:[#allocation3] sm:$0xf]
    %v101 = vld [vmem:[#allocation3 + $0x4] sm:$0xf]
    %v102 = vld [vmem:[#allocation6] sm:$0xf]
    %v103 = vld [vmem:[#allocation6 + $0x4] sm:$0xf]
    %v104 = vld [vmem:[#allocation6 + $0x8] sm:$0xf]
    %v105 = vld [vmem:[#allocation6 + $0xc] sm:$0xf]
    %v108 = vunpack.c.l.b16 %v100
    %v109 = vunpack.c.l.b16 %v101
    %v110 = vpack.c.b16 %v109, %v108
    %v115 = vunpack.c.l.b16 %v102
    %v116 = vunpack.c.l.b16 %v103
    %v117 = vunpack.c.l.b16 %v104
    %v118 = vunpack.c.l.b16 %v105
    %v119 = vpack.c.b16 %v116, %v115
    %v120 = vpack.c.b16 %v118, %v117
    %vm123 = vcmask 261120
    %v125 = vsel %vm123, %v110, 0
    %127 = vmatprep.subr.bf16.mxu0 0
    %128 = vmatpush1.bf16.msra.mxu0 0
    %129 = vmatprep.subr.bf16.mxu0 0
    %130 = vmatpush1.bf16.msra.mxu0 0
    %131 = vmatprep.subr.bf16.mxu0 0
    %132 = vmatpush1.bf16.msra.mxu0 0
    %133 = vmatprep.subr.bf16.mxu0 0
    %134 = vmatpush1.bf16.msra.mxu0 0
    %135 = vmatprep.subr.bf16.mxu0 0
    %136 = vmatpush1.bf16.msra.mxu0 0
    %137 = vmatprep.subr.bf16.mxu0 0
    %138 = vmatpush1.bf16.msra.mxu0 0
    %139 = vmatprep.subr.bf16.mxu0 0
    %140 = vmatpush1.bf16.msra.mxu0 %v120
    %141 = vmatprep.subr.bf16.mxu0 0
    %142 = vmatpush1.bf16.msra.mxu0 %v119
    %143 = vmatprep.subr.bf16.mxu0 0
    %144 = vmatpush2.bf16.msra.mxu0 0
    %145 = vmatprep.subr.bf16.mxu0 0
    %146 = vmatpush2.bf16.msra.mxu0 0
    %147 = vmatprep.subr.bf16.mxu0 0
    %148 = vmatpush2.bf16.msra.mxu0 0
    %149 = vmatprep.subr.bf16.mxu0 0
    %150 = vmatpush2.bf16.msra.mxu0 0
    %151 = vmatprep.subr.bf16.mxu0 0
    %152 = vmatpush2.bf16.msra.mxu0 0
    %153 = vmatprep.subr.bf16.mxu0 0
    %154 = vmatpush2.bf16.msra.mxu0 0
    %155 = vmatprep.subr.bf16.mxu0 0
    %156 = vmatpush2.bf16.msra.mxu0 0
    %157 = vmatprep.subr.bf16.mxu0 0
    %158 = vmatpush2.bf16.msra.mxu0 0
    %159 = vmatprep.mubr.bf16.mxu0 0
    %160 = vmatmul.mubr.bf16.gmra.mxu0 %v125
    %v161 = vpop.f32.mrf.mxu0
    %v162 = vadd.f32 0.0, %v161
    %v163 = vpop.f32.mrf.mxu0
    %v164 = vpop.f32.mrf.mxu0
    %v165 = vadd.f32 0.0, %v164
    %v166 = vpop.f32.mrf.mxu0
    %167 = vdwg.mxu0
    %v168 = vmax.f32 %v162, 0.0
    %v169 = vmax.f32 %v165, 0.0
    %v170 = vld [vmem:[#allocation8] sm:$0xf]
    %v171 = vld [vmem:[#allocation8 + $0x4] sm:$0xf]
    %v172 = vld [vmem:[#allocation8 + $0x8] sm:$0xf]
    %v173 = vld [vmem:[#allocation8 + $0xc] sm:$0xf]
    %v174 = vld [vmem:[#allocation8 + $0x10] sm:$0xf]
    %v175 = vld [vmem:[#allocation8 + $0x14] sm:$0xf]
    %v176 = vld [vmem:[#allocation8 + $0x18] sm:$0xf]
    %v177 = vld [vmem:[#allocation8 + $0x1c] sm:$0xf]
    %v178 = vld [vmem:[#allocation8 + $0x20] sm:$0xf]
    %v179 = vld [vmem:[#allocation8 + $0x24] sm:$0xf]
    %v180 = vld [vmem:[#allocation8 + $0x28] sm:$0xf]
    %v181 = vld [vmem:[#allocation8 + $0x2c] sm:$0xf]
    %v182 = vld [vmem:[#allocation8 + $0x30] sm:$0xf]
    %v183 = vld [vmem:[#allocation8 + $0x34] sm:$0xf]
    %v184 = vld [vmem:[#allocation8 + $0x38] sm:$0xf]
    %v185 = vld [vmem:[#allocation8 + $0x3c] sm:$0xf]
    %v186 = vpack.c.bf16 %v169, %v168
    %v187 = vld [vmem:[%s4] sm:$0x1]
    %v188 = vlaneseq
    %v189 = vshrl.u32 %v188, 7
    %v190 = vsub.s32 0, %v189
    %v191 = vrot.slane %v187, %v190
    %v208 = vunpack.c.l.b16 %v170
    %v209 = vunpack.c.l.b16 %v171
    %v210 = vunpack.c.l.b16 %v172
    %v211 = vunpack.c.l.b16 %v173
    %v212 = vunpack.c.l.b16 %v174
    %v213 = vunpack.c.l.b16 %v175
    %v214 = vunpack.c.l.b16 %v176
    %v215 = vunpack.c.l.b16 %v177
    %v216 = vunpack.c.l.b16 %v178
    %v217 = vunpack.c.l.b16 %v179
    %v218 = vunpack.c.l.b16 %v180
    %v219 = vunpack.c.l.b16 %v181
    %v220 = vunpack.c.l.b16 %v182
    %v221 = vunpack.c.l.b16 %v183
    %v222 = vunpack.c.l.b16 %v184
    %v223 = vunpack.c.l.b16 %v185
    %v224 = vpack.c.b16 %v209, %v208
    %v225 = vpack.c.b16 %v211, %v210
    %v226 = vpack.c.b16 %v213, %v212
    %v227 = vpack.c.b16 %v215, %v214
    %v228 = vpack.c.b16 %v217, %v216
    %v229 = vpack.c.b16 %v219, %v218
    %v230 = vpack.c.b16 %v221, %v220
    %v231 = vpack.c.b16 %v223, %v222
    %240 = vmatprep.subr.bf16.mxu0 0
    %241 = vmatpush1.bf16.msra.mxu0 %v231
    %242 = vmatprep.subr.bf16.mxu0 0
    %243 = vmatpush1.bf16.msra.mxu0 %v230
    %244 = vmatprep.subr.bf16.mxu0 0
    %245 = vmatpush1.bf16.msra.mxu0 %v229
    %246 = vmatprep.subr.bf16.mxu0 0
    %247 = vmatpush1.bf16.msra.mxu0 %v228
    %248 = vmatprep.subr.bf16.mxu0 0
    %249 = vmatpush1.bf16.msra.mxu0 %v227
    %250 = vmatprep.subr.bf16.mxu0 0
    %251 = vmatpush1.bf16.msra.mxu0 %v226
    %252 = vmatprep.subr.bf16.mxu0 0
    %253 = vmatpush1.bf16.msra.mxu0 %v225
    %254 = vmatprep.subr.bf16.mxu0 0
    %255 = vmatpush1.bf16.msra.mxu0 %v224
    %256 = vmatprep.subr.bf16.mxu0 0
    %257 = vmatpush2.bf16.msra.mxu0 0
    %258 = vmatprep.subr.bf16.mxu0 0
    %259 = vmatpush2.bf16.msra.mxu0 0
    %260 = vmatprep.subr.bf16.mxu0 0
    %261 = vmatpush2.bf16.msra.mxu0 0
    %262 = vmatprep.subr.bf16.mxu0 0
    %263 = vmatpush2.bf16.msra.mxu0 0
    %264 = vmatprep.subr.bf16.mxu0 0
    %265 = vmatpush2.bf16.msra.mxu0 0
    %266 = vmatprep.subr.bf16.mxu0 0
    %267 = vmatpush2.bf16.msra.mxu0 0
    %268 = vmatprep.subr.bf16.mxu0 0
    %269 = vmatpush2.bf16.msra.mxu0 0
    %270 = vmatprep.subr.bf16.mxu0 0
    %271 = vmatpush2.bf16.msra.mxu0 0
    %272 = vmatprep.mubr.bf16.mxu0 0
    %273 = vmatmul.mubr.bf16.gmra.mxu0 %v186
    %v274 = vpop.f32.mrf.mxu0
    %v275 = vadd.f32 %v191, %v274
    %v276 = vpop.f32.mrf.mxu0
    %v277 = vpop.f32.mrf.mxu0
    %v278 = vadd.f32 %v191, %v277
    %v279 = vpop.f32.mrf.mxu0
    %280 = vdwg.mxu0
    %v281 = vmax.f32 %v275, 0.0
    %v282 = vmax.f32 %v278, 0.0
    %v283 = vld [vmem:[#allocation9] sm:$0xf]
    %v284 = vld [vmem:[#allocation9 + $0x4] sm:$0xf]
    %v285 = vld [vmem:[#allocation9 + $0x8] sm:$0xf]
    %v286 = vld [vmem:[#allocation9 + $0xc] sm:$0xf]
    %v287 = vld [vmem:[#allocation9 + $0x10] sm:$0xf]
    %v288 = vld [vmem:[#allocation9 + $0x14] sm:$0xf]
    %v289 = vld [vmem:[#allocation9 + $0x18] sm:$0xf]
    %v290 = vld [vmem:[#allocation9 + $0x1c] sm:$0xf]
    %v291 = vld [vmem:[#allocation9 + $0x20] sm:$0xf]
    %v292 = vld [vmem:[#allocation9 + $0x24] sm:$0xf]
    %v293 = vld [vmem:[#allocation9 + $0x28] sm:$0xf]
    %v294 = vld [vmem:[#allocation9 + $0x2c] sm:$0xf]
    %v295 = vld [vmem:[#allocation9 + $0x30] sm:$0xf]
    %v296 = vld [vmem:[#allocation9 + $0x34] sm:$0xf]
    %v297 = vld [vmem:[#allocation9 + $0x38] sm:$0xf]
    %v298 = vld [vmem:[#allocation9 + $0x3c] sm:$0xf]
    %v299 = vpack.c.bf16 %v282, %v281
    %v300 = vld [vmem:[%s4 + $0x1] sm:$0x1]
    %v301 = vlaneseq
    %v302 = vshrl.u32 %v301, 7
    %v303 = vsub.s32 0, %v302
    %v304 = vrot.slane %v300, %v303
    %v321 = vunpack.c.l.b16 %v283
    %v322 = vunpack.c.l.b16 %v284
    %v323 = vunpack.c.l.b16 %v285
    %v324 = vunpack.c.l.b16 %v286
    %v325 = vunpack.c.l.b16 %v287
    %v326 = vunpack.c.l.b16 %v288
    %v327 = vunpack.c.l.b16 %v289
    %v328 = vunpack.c.l.b16 %v290
    %v329 = vunpack.c.l.b16 %v291
    %v330 = vunpack.c.l.b16 %v292
    %v331 = vunpack.c.l.b16 %v293
    %v332 = vunpack.c.l.b16 %v294
    %v333 = vunpack.c.l.b16 %v295
    %v334 = vunpack.c.l.b16 %v296
    %v335 = vunpack.c.l.b16 %v297
    %v336 = vunpack.c.l.b16 %v298
    %v337 = vpack.c.b16 %v322, %v321
    %v338 = vpack.c.b16 %v324, %v323
    %v339 = vpack.c.b16 %v326, %v325
    %v340 = vpack.c.b16 %v328, %v327
    %v341 = vpack.c.b16 %v330, %v329
    %v342 = vpack.c.b16 %v332, %v331
    %v343 = vpack.c.b16 %v334, %v333
    %v344 = vpack.c.b16 %v336, %v335
    %353 = vmatprep.subr.bf16.mxu0 0
    %354 = vmatpush1.bf16.msra.mxu0 %v344
    %355 = vmatprep.subr.bf16.mxu0 0
    %356 = vmatpush1.bf16.msra.mxu0 %v343
    %357 = vmatprep.subr.bf16.mxu0 0
    %358 = vmatpush1.bf16.msra.mxu0 %v342
    %359 = vmatprep.subr.bf16.mxu0 0
    %360 = vmatpush1.bf16.msra.mxu0 %v341
    %361 = vmatprep.subr.bf16.mxu0 0
    %362 = vmatpush1.bf16.msra.mxu0 %v340
    %363 = vmatprep.subr.bf16.mxu0 0
    %364 = vmatpush1.bf16.msra.mxu0 %v339
    %365 = vmatprep.subr.bf16.mxu0 0
    %366 = vmatpush1.bf16.msra.mxu0 %v338
    %367 = vmatprep.subr.bf16.mxu0 0
    %368 = vmatpush1.bf16.msra.mxu0 %v337
    %369 = vmatprep.subr.bf16.mxu0 0
    %370 = vmatpush2.bf16.msra.mxu0 0
    %371 = vmatprep.subr.bf16.mxu0 0
    %372 = vmatpush2.bf16.msra.mxu0 0
    %373 = vmatprep.subr.bf16.mxu0 0
    %374 = vmatpush2.bf16.msra.mxu0 0
    %375 = vmatprep.subr.bf16.mxu0 0
    %376 = vmatpush2.bf16.msra.mxu0 0
    %377 = vmatprep.subr.bf16.mxu0 0
    %378 = vmatpush2.bf16.msra.mxu0 0
    %379 = vmatprep.subr.bf16.mxu0 0
    %380 = vmatpush2.bf16.msra.mxu0 0
    %381 = vmatprep.subr.bf16.mxu0 0
    %382 = vmatpush2.bf16.msra.mxu0 0
    %383 = vmatprep.subr.bf16.mxu0 0
    %384 = vmatpush2.bf16.msra.mxu0 0
    %385 = vmatprep.mubr.bf16.mxu0 0
    %386 = vmatmul.mubr.bf16.gmra.mxu0 %v299
    %v387 = vpop.f32.mrf.mxu0
    %v388 = vadd.f32 %v304, %v387
    %v389 = vpop.f32.mrf.mxu0
    %v390 = vpop.f32.mrf.mxu0
    %v391 = vadd.f32 %v304, %v390
    %v392 = vpop.f32.mrf.mxu0
    %393 = vdwg.mxu0
    %v394 = vmax.f32 %v388, 0.0
    %v395 = vmax.f32 %v391, 0.0
    %v396 = vld [vmem:[#allocation11] sm:$0xf]
    %v397 = vld [vmem:[#allocation11 + $0x4] sm:$0xf]
    %v398 = vld [vmem:[#allocation11 + $0x8] sm:$0xf]
    %v399 = vld [vmem:[#allocation11 + $0xc] sm:$0xf]
    %v400 = vld [vmem:[#allocation11 + $0x10] sm:$0xf]
    %v401 = vld [vmem:[#allocation11 + $0x14] sm:$0xf]
    %v402 = vld [vmem:[#allocation11 + $0x18] sm:$0xf]
    %v403 = vld [vmem:[#allocation11 + $0x1c] sm:$0xf]
    %v404 = vld [vmem:[#allocation11 + $0x20] sm:$0xf]
    %v405 = vld [vmem:[#allocation11 + $0x24] sm:$0xf]
    %v406 = vld [vmem:[#allocation11 + $0x28] sm:$0xf]
    %v407 = vld [vmem:[#allocation11 + $0x2c] sm:$0xf]
    %v408 = vld [vmem:[#allocation11 + $0x30] sm:$0xf]
    %v409 = vld [vmem:[#allocation11 + $0x34] sm:$0xf]
    %v410 = vld [vmem:[#allocation11 + $0x38] sm:$0xf]
    %v411 = vld [vmem:[#allocation11 + $0x3c] sm:$0xf]
    %v412 = vpack.c.bf16 %v395, %v394
    %v413 = vld [vmem:[%s6] sm:$0x1]
    %v415 = vlaneseq
    %v416 = vshrl.u32 %v415, 7
    %v417 = vsub.s32 0, %v416
    %v418 = vrot.slane %v413, %v417
    %v436 = vunpack.c.l.b16 %v396
    %v437 = vunpack.c.l.b16 %v397
    %v438 = vunpack.c.l.b16 %v398
    %v439 = vunpack.c.l.b16 %v399
    %v440 = vunpack.c.l.b16 %v400
    %v441 = vunpack.c.l.b16 %v401
    %v442 = vunpack.c.l.b16 %v402
    %v443 = vunpack.c.l.b16 %v403
    %v444 = vunpack.c.l.b16 %v404
    %v445 = vunpack.c.l.b16 %v405
    %v446 = vunpack.c.l.b16 %v406
    %v447 = vunpack.c.l.b16 %v407
    %v448 = vunpack.c.l.b16 %v408
    %v449 = vunpack.c.l.b16 %v409
    %v450 = vunpack.c.l.b16 %v410
    %v451 = vunpack.c.l.b16 %v411
    %v452 = vpack.c.b16 %v437, %v436
    %v453 = vpack.c.b16 %v439, %v438
    %v454 = vpack.c.b16 %v441, %v440
    %v455 = vpack.c.b16 %v443, %v442
    %v456 = vpack.c.b16 %v445, %v444
    %v457 = vpack.c.b16 %v447, %v446
    %v458 = vpack.c.b16 %v449, %v448
    %v459 = vpack.c.b16 %v451, %v450
    %468 = vmatprep.subr.bf16.mxu0 0
    %469 = vmatpush1.bf16.msra.mxu0 %v459
    %470 = vmatprep.subr.bf16.mxu0 0
    %471 = vmatpush1.bf16.msra.mxu0 %v458
    %472 = vmatprep.subr.bf16.mxu0 0
    %473 = vmatpush1.bf16.msra.mxu0 %v457
    %474 = vmatprep.subr.bf16.mxu0 0
    %475 = vmatpush1.bf16.msra.mxu0 %v456
    %476 = vmatprep.subr.bf16.mxu0 0
    %477 = vmatpush1.bf16.msra.mxu0 %v455
    %478 = vmatprep.subr.bf16.mxu0 0
    %479 = vmatpush1.bf16.msra.mxu0 %v454
    %480 = vmatprep.subr.bf16.mxu0 0
    %481 = vmatpush1.bf16.msra.mxu0 %v453
    %482 = vmatprep.subr.bf16.mxu0 0
    %483 = vmatpush1.bf16.msra.mxu0 %v452
    %484 = vmatprep.subr.bf16.mxu0 0
    %485 = vmatpush2.bf16.msra.mxu0 0
    %486 = vmatprep.subr.bf16.mxu0 0
    %487 = vmatpush2.bf16.msra.mxu0 0
    %488 = vmatprep.subr.bf16.mxu0 0
    %489 = vmatpush2.bf16.msra.mxu0 0
    %490 = vmatprep.subr.bf16.mxu0 0
    %491 = vmatpush2.bf16.msra.mxu0 0
    %492 = vmatprep.subr.bf16.mxu0 0
    %493 = vmatpush2.bf16.msra.mxu0 0
    %494 = vmatprep.subr.bf16.mxu0 0
    %495 = vmatpush2.bf16.msra.mxu0 0
    %496 = vmatprep.subr.bf16.mxu0 0
    %497 = vmatpush2.bf16.msra.mxu0 0
    %498 = vmatprep.subr.bf16.mxu0 0
    %499 = vmatpush2.bf16.msra.mxu0 0
    %500 = vmatprep.mubr.bf16.mxu0 0
    %501 = vmatmul.mubr.bf16.gmra.mxu0 %v412
    %v502 = vpop.f32.mrf.mxu0
    %v503 = vadd.f32 %v418, %v502
    %v504 = vpop.f32.mrf.mxu0
    %v505 = vpop.f32.mrf.mxu0
    %v506 = vadd.f32 %v418, %v505
    %v507 = vpop.f32.mrf.mxu0
    %508 = vdwg.mxu0
    %509 = vmax.xlane.f32.xlu0 %v503
    %v510 = vpop.xlane.xlu0 %509
    %511 = vmax.xlane.f32.xlu0 %v506
    %v512 = vpop.xlane.xlu0 %511
    %v513 = vsub.f32 %v503, %v510
    %v514 = vsub.f32 %v506, %v512
    %v515 = vmul.f32 %v513, 1.442695
    %v516 = vpow.pop %v515
    %v517 = vmul.f32 %v514, 1.442695
    %v518 = vpow.pop %v517
    %519 = vadd.xlane.f32.xlu0 %v516
    %v520 = vpop.xlane.xlu0 %519
    %521 = vadd.xlane.f32.xlu0 %v518
    %v522 = vpop.xlane.xlu0 %521
    %v523 = vrcp.pop %v520
    %v524 = vrcp.pop %v522
    %v525 = vmul.f32 %v516, %v523
    %v526 = vmul.f32 %v518, %v524
    %s527 = sld [smem:[#allocation2]]
    %v528 = vstv %s527
    %v529 = vmul.f32 %v525, %v528
    %v530 = vmul.f32 %v526, %v528
    %531 = vst [vmem:[#allocation12] sm:$0xff] %v529
    %532 = vst [vmem:[#allocation12 + $0x8] sm:$0xff] %v530
    // Predicated region
    $region54: #{tpu_custom_call.1} parent=1 // pred_check
      _
    $region55: #{tpu_custom_call.1} parent=1 // pred_check_branch
      %534 = sbr.rel (0) target = $region57
    $region56: #{tpu_custom_call.1} parent=1 // pred_region
      %s536 = ssub.s32 256, 256
      %537 = vsyncadd [#allocation5], %s536
      %s538 = sshll.u32 [#allocation12], 4
      %s539 = int_to_ptr.vmem [resolvable:$true] %s538
      %544 = dma.vmem_to_hbm [thread:$0]  %s539, 256, %s8, [#allocation5], 128, 128, 8
    $region57: #{tpu_custom_call.1} parent=1 // pred_fallthru
      _
    // Predicated region
    $region58: #{tpu_custom_call.1} parent=1 // pred_check
      _
    $region59: #{tpu_custom_call.1} parent=1 // pred_check_branch
      %546 = sbr.rel (0) target = $region61
    $region60: #{tpu_custom_call.1} parent=1 // pred_region
      %547 = dma.done [#allocation5], 256
    $region61: #{tpu_custom_call.1} parent=1 // pred_fallthru
      _
    %548 = vsyncpa [#allocation4], 1
    %549 = vsyncpa [#allocation7], 1
    %550 = vsyncpa [#allocation10], 1
    %551 = vsyncpa [#allocation5], 1

</llo_original>
